<compile_context>
chip_gen: v7x
topology: tpu7x:2x2x1
jax: 0.10.0
libtpu: 0.0.40
codegen_flags: <defaults>
</compile_context>

<pallas_src>
import functools

import jax
import jax.numpy as jnp
from jax.experimental import pallas as pl
from jax.experimental.pallas import tpu as pltpu


def _extract_entities_kernel(idx_ref, t1_ref, b1_ref, w2_ref, b2_ref, o_ref,
                             *, B, L, K, k_in, Vp, c_mid, c_out, n_ext):
    """Single grid step: both convs for the whole (small) batch.

    Layout: channels on sublanes, flattened spatial (p = b*L*L + y*L + x) on lanes.

    idx_ref: (k_in*K*K, n_ext) int32   per-tap pre-shifted flattened indices
    t1_ref : (k_in, c_mid, K*K*Vp) f32 conv1 weights with the embedding folded in
    b1_ref : (c_mid, 1) f32
    w2_ref : (c_out, K*K*c_mid) f32    conv2 weights, taps flattened
    b2_ref : (c_out, 1) f32
    o_ref  : (B, c_out, L*L) f32       NCHW-flat output (lane-dense stores)
    """
    KK = K * K
    P = L * L
    N = B * P
    shifts = [dh * L + dw for dh in range(K) for dw in range(K)]

    idx_all = idx_ref[...]                                      # (k_in*KK, n_ext)
    iota_v = jax.lax.broadcasted_iota(jnp.int32, (Vp, n_ext), 0)

    # ---- Conv1 + ReLU: one merged one-hot matmul per input group -------------
    # one-hot(idx) has vocab (contraction) on sublanes and spatial on lanes, so
    # the MXU contraction is K*K*Vp wide instead of c_in=3.
    acc1 = jnp.zeros((c_mid, n_ext), jnp.float32)
    for g in range(k_in):
        oh_taps = []
        for t in range(KK):
            row = idx_all[g * KK + t:g * KK + t + 1, :]          # (1, n_ext)
            oh_taps.append((iota_v == row).astype(jnp.float32))  # (Vp, n_ext)
        oh_cat = jnp.concatenate(oh_taps, axis=0)                # (KK*Vp, n_ext)
        acc1 = acc1 + jax.lax.dot_general(
            t1_ref[g], oh_cat,
            dimension_numbers=(((1,), (0,)), ((), ())),
            preferred_element_type=jnp.float32)
    h1 = jnp.maximum(acc1 + b1_ref[...], 0.0)                    # (c_mid, n_ext)

    # ---- Conv2 + ReLU: merge the K*K taps into one contraction of K*K*c_mid --
    # tap (dh, dw) of the flattened grid is a static lane shift by dh*L + dw;
    # h1 is computed n_ext >= N + max_shift wide so the slices stay in bounds
    # (the extra columns are never read for valid output positions).
    h1_cat = jnp.concatenate([h1[:, s:s + N] for s in shifts], axis=0)  # (KK*c_mid, N)
    acc2 = jax.lax.dot_general(
        w2_ref[...], h1_cat,
        dimension_numbers=(((1,), (0,)), ((), ())),
        preferred_element_type=jnp.float32)
    out = jnp.maximum(acc2 + b2_ref[...], 0.0)                   # (c_out, N)

    # Lane-dense (c_out, L*L) stores, one per batch element (offsets are
    # multiples of 128 for L=16).
    for b in range(B):
        o_ref[b, :, :] = out[:, b * P:(b + 1) * P]


def prepare_params(params, kernel_size=2):
    """One-time parameter preprocessing (hoisted out of the per-call forward).

    Folds the embedding into conv1: T1[g, dh, dw, v, m] = sum_d emb[v, d] *
    w1[m, g*n_dim + d, dh, dw], padded to Vp vocab rows and flattened so conv1
    is a single one-hot matmul with contraction K*K*Vp.  Conv2 weights are
    flattened to (c_out, K*K*c_mid) so its K*K taps merge into one contraction.
    """
    K = kernel_size
    emb = params["embed"].astype(jnp.float32)        # (vocab, n_dim)
    w1 = params["w1_oihw"].astype(jnp.float32)       # (c_mid, k_in*n_dim, K, K)
    w2 = params["w2_oihw"].astype(jnp.float32)       # (c_out, c_mid, K, K)
    vocab, n_dim = emb.shape
    c_mid, c_in, kh, kw = w1.shape
    assert kh == K and kw == K
    k_in = c_in // n_dim
    c_out = w2.shape[0]
    Vp = ((vocab + 127) // 128) * 128                # pad vocab to lane multiple

    w1r = w1.reshape(c_mid, k_in, n_dim, K, K)
    t1 = jnp.einsum("vd,mgdab->gabvm", emb, w1r,
                    precision=jax.lax.Precision.HIGHEST)   # (k_in, K, K, vocab, c_mid)
    t1 = jnp.pad(t1, ((0, 0), (0, 0), (0, 0), (0, Vp - vocab), (0, 0)))
    t1 = jnp.transpose(t1, (0, 4, 1, 2, 3)).reshape(k_in, c_mid, K * K * Vp)

    w2cat = jnp.transpose(w2, (0, 2, 3, 1)).reshape(c_out, K * K * c_mid)

    return {
        "t1": t1,                                           # (k_in, c_mid, K*K*Vp)
        "b1": params["b1"].reshape(c_mid, 1).astype(jnp.float32),
        "w2": w2cat,                                        # (c_out, K*K*c_mid)
        "b2": params["b2"].reshape(c_out, 1).astype(jnp.float32),
    }


def extract_entities_forward(x_idx, tables, kernel_size=2):
    """Full ExtractEntities.forward.

    x_idx: int32 indices (B, k_in, L, L) (or (k_in, L, L) -> unsqueezed).
    Returns (B, k_out, L-2, L-2) float32 NCHW, matching PyTorch.
    """
    if x_idx.ndim <= 3:
        x_idx = x_idx[None]
    K = kernel_size
    KK = K * K
    t1, b1, w2, b2 = tables["t1"], tables["b1"], tables["w2"], tables["b2"]
    k_in, c_mid, _ = t1.shape
    Vp = t1.shape[2] // KK
    c_out = w2.shape[0]

    B, kin_x, L, _ = x_idx.shape
    assert kin_x == k_in
    P = L * L
    N = B * P
    max_shift = (K - 1) * (L + 1)
    # Extend the flattened axis so conv2's static tap slices stay in bounds;
    # round the extension up to a whole 128-lane tile.
    n_ext = N + ((max_shift + 127) // 128) * 128

    # Per-call input prep (one tiny int fusion): flatten to p = b*L*L + y*L + x
    # and pre-shift one row per conv1 tap so the kernel never shifts indices.
    idx_flat = jnp.transpose(x_idx, (1, 0, 2, 3)).reshape(k_in, N)
    idx_pad = jnp.pad(idx_flat, ((0, 0), (0, n_ext + max_shift - N)))
    shifts = [dh * L + dw for dh in range(K) for dw in range(K)]
    idx_taps = jnp.stack([idx_pad[:, s:s + n_ext] for s in shifts], axis=1)
    idx_taps = idx_taps.reshape(k_in * KK, n_ext).astype(jnp.int32)

    kernel = functools.partial(
        _extract_entities_kernel,
        B=B, L=L, K=K, k_in=k_in, Vp=Vp, c_mid=c_mid, c_out=c_out, n_ext=n_ext)

    out_flat = pl.pallas_call(
        kernel,
        out_shape=jax.ShapeDtypeStruct((B, c_out, P), jnp.float32),
        grid_spec=pltpu.PrefetchScalarGridSpec(
            num_scalar_prefetch=0,
            grid=(1,),  # single step: per-step overhead > compute at these sizes
            in_specs=[
                pl.BlockSpec((k_in * KK, n_ext), lambda i: (0, 0)),
                pl.BlockSpec((k_in, c_mid, KK * Vp), lambda i: (0, 0, 0)),
                pl.BlockSpec((c_mid, 1), lambda i: (0, 0)),
                pl.BlockSpec((c_out, KK * c_mid), lambda i: (0, 0)),
                pl.BlockSpec((c_out, 1), lambda i: (0, 0)),
            ],
            out_specs=pl.BlockSpec((B, c_out, P), lambda i: (0, 0, 0)),
        ),
        compiler_params=pltpu.CompilerParams(
            dimension_semantics=("arbitrary",)),
    )(idx_taps, t1, b1, w2, b2)

    # NCHW-flat -> NCHW: cheap split-reshape + slice of the valid window
    # (the only per-call glue left besides the int-index prep above).
    h_out = L - 2 * (K - 1)
    return out_flat.reshape(B, c_out, L, L)[:, :, :h_out, :h_out]


def init_params(key, k_out, k_in=1, vocab_size=117, n_dim=3, kernel_size=2):
    assert k_out % 2 == 0
    c_in = n_dim * k_in
    c_mid = k_out // 2
    k_e, k_w1, k_b1, k_w2, k_b2 = jax.random.split(key, 5)
    return {
        "embed": jax.random.normal(k_e, (vocab_size, n_dim), jnp.float32),
        "w1_oihw": 0.1 * jax.random.normal(
            k_w1, (c_mid, c_in, kernel_size, kernel_size), jnp.float32),
        "b1": 0.1 * jax.random.normal(k_b1, (c_mid,), jnp.float32),
        "w2_oihw": 0.1 * jax.random.normal(
            k_w2, (k_out, c_mid, kernel_size, kernel_size), jnp.float32),
        "b2": 0.1 * jax.random.normal(k_b2, (k_out,), jnp.float32),
    }


def _reference_forward(x_idx, params):
    """Pure-JAX reference (embedding gather + lax conv) for correctness check."""
    if x_idx.ndim <= 3:
        x_idx = x_idx[None]
    emb = params["embed"]
    B, k_in, L, _ = x_idx.shape
    n_dim = emb.shape[1]
    x = emb[x_idx]
    x = jnp.swapaxes(x, -1, -3)
    x = jnp.swapaxes(x, -1, -2)
    x = x.reshape(B, k_in * n_dim, L, L).astype(jnp.float32)
    dn = ("NCHW", "OIHW", "NCHW")
    h = jax.lax.conv_general_dilated(x, params["w1_oihw"], (1, 1), "VALID",
                                     dimension_numbers=dn)
    h = jnp.maximum(h + params["b1"][None, :, None, None], 0.0)
    h = jax.lax.conv_general_dilated(h, params["w2_oihw"], (1, 1), "VALID",
                                     dimension_numbers=dn)
    return jnp.maximum(h + params["b2"][None, :, None, None], 0.0)


if __name__ == "__main__":
    key = jax.random.PRNGKey(0)
    k_params, k_x = jax.random.split(key)

    # Small shapes consistent with the module: batch=2, k_in=1, L=16, k_out=16
    B, k_in, L = 2, 1, 16
    k_out, vocab_size, n_dim = 16, 117, 3
    kernel_size = 2

    params = init_params(k_params, k_out=k_out, k_in=k_in,
                         vocab_size=vocab_size, n_dim=n_dim,
                         kernel_size=kernel_size)
    tables = prepare_params(params, kernel_size=kernel_size)  # one-time prep
    x_idx = jax.random.randint(k_x, (B, k_in, L, L), 0, vocab_size,
                               dtype=jnp.int32)

    fwd = jax.jit(extract_entities_forward, static_argnames=("kernel_size",))
    out = jax.block_until_ready(fwd(x_idx, tables, kernel_size=kernel_size))

    ref = jax.block_until_ready(_reference_forward(x_idx, params))
    assert out.shape == (B, k_out, L - 2, L - 2), out.shape
    assert jnp.allclose(out, ref, atol=1e-3, rtol=1e-3), \
        float(jnp.max(jnp.abs(out - ref)))

    print("KERNEL_OK")
</pallas_src>

<mosaic_0001>
module attributes {stable_mosaic.version = 11 : i64} {
  func.func @_extract_entities_kernel(%arg0: i32, %arg1: memref<4x640xi32, #tpu.memory_space<vmem>>, %arg2: memref<1x8x512xf32, #tpu.memory_space<vmem>>, %arg3: memref<8x1xf32, #tpu.memory_space<vmem>>, %arg4: memref<16x32xf32, #tpu.memory_space<vmem>>, %arg5: memref<16x1xf32, #tpu.memory_space<vmem>>, %arg6: memref<2x16x256xf32, #tpu.memory_space<vmem>>) attributes {dimension_semantics = [#tpu.dimension_semantics<arbitrary>], iteration_bounds = array<i64: 1>, scalar_prefetch = 0 : i64, scratch_operands = 0 : i64, tpu.core_type = #tpu.core_type<tc>, window_params = [{pipeline_mode = #tpu.pipeline_mode<synchronous>, transform_indices = @transform_0, window_bounds = array<i64: 4, 640>}, {pipeline_mode = #tpu.pipeline_mode<synchronous>, transform_indices = @transform_1, window_bounds = array<i64: 1, 8, 512>}, {pipeline_mode = #tpu.pipeline_mode<synchronous>, transform_indices = @transform_2, window_bounds = array<i64: 8, 1>}, {pipeline_mode = #tpu.pipeline_mode<synchronous>, transform_indices = @transform_3, window_bounds = array<i64: 16, 32>}, {pipeline_mode = #tpu.pipeline_mode<synchronous>, transform_indices = @transform_4, window_bounds = array<i64: 16, 1>}, {pipeline_mode = #tpu.pipeline_mode<synchronous>, transform_indices = @transform_5, window_bounds = array<i64: 2, 16, 256>}]} {
    %c0 = arith.constant 0 : index
    %c0_0 = arith.constant 0 : index
    %0 = vector.load %arg1[%c0, %c0_0] : memref<4x640xi32, #tpu.memory_space<vmem>>, vector<4x640xi32>
    %1 = tpu.iota {dimensions = array<i32: 0>} : vector<128x640xi32>
    %cst = arith.constant 0.000000e+00 : f32
    %2 = vector.broadcast %cst : f32 to vector<8x640xf32>
    %3 = vector.extract_strided_slice %0 {offsets = [0, 0], sizes = [1, 640], strides = [1, 1]} : vector<4x640xi32> to vector<1x640xi32>
    %4 = vector.broadcast %3 : vector<1x640xi32> to vector<128x640xi32>
    %5 = arith.cmpi eq, %1, %4 : vector<128x640xi32>
    %6 = arith.extui %5 : vector<128x640xi1> to vector<128x640xi32>
    %7 = arith.sitofp %6 : vector<128x640xi32> to vector<128x640xf32>
    %8 = vector.extract_strided_slice %0 {offsets = [1, 0], sizes = [1, 640], strides = [1, 1]} : vector<4x640xi32> to vector<1x640xi32>
    %9 = vector.broadcast %8 : vector<1x640xi32> to vector<128x640xi32>
    %10 = arith.cmpi eq, %1, %9 : vector<128x640xi32>
    %11 = arith.extui %10 : vector<128x640xi1> to vector<128x640xi32>
    %12 = arith.sitofp %11 : vector<128x640xi32> to vector<128x640xf32>
    %13 = vector.extract_strided_slice %0 {offsets = [2, 0], sizes = [1, 640], strides = [1, 1]} : vector<4x640xi32> to vector<1x640xi32>
    %14 = vector.broadcast %13 : vector<1x640xi32> to vector<128x640xi32>
    %15 = arith.cmpi eq, %1, %14 : vector<128x640xi32>
    %16 = arith.extui %15 : vector<128x640xi1> to vector<128x640xi32>
    %17 = arith.sitofp %16 : vector<128x640xi32> to vector<128x640xf32>
    %18 = vector.extract_strided_slice %0 {offsets = [3, 0], sizes = [1, 640], strides = [1, 1]} : vector<4x640xi32> to vector<1x640xi32>
    %19 = vector.broadcast %18 : vector<1x640xi32> to vector<128x640xi32>
    %20 = arith.cmpi eq, %1, %19 : vector<128x640xi32>
    %21 = arith.extui %20 : vector<128x640xi1> to vector<128x640xi32>
    %22 = arith.sitofp %21 : vector<128x640xi32> to vector<128x640xf32>
    %23 = tpu.concatenate %7, %12, %17, %22 in 0 : vector<128x640xf32>, vector<128x640xf32>, vector<128x640xf32>, vector<128x640xf32> -> vector<512x640xf32>
    %c0_1 = arith.constant 0 : index
    %c0_2 = arith.constant 0 : index
    %c0_3 = arith.constant 0 : index
    %24 = vector.load %arg2[%c0_1, %c0_2, %c0_3] : memref<1x8x512xf32, #tpu.memory_space<vmem>>, vector<1x8x512xf32>
    %25 = vector.shape_cast %24 : vector<1x8x512xf32> to vector<8x512xf32>
    %cst_4 = arith.constant dense<0.000000e+00> : vector<8x640xf32>
    %26 = tpu.matmul %25, %23, %cst_4 {dimension_numbers = #tpu.dot_dimension_numbers<[1], [0], [0], [1], [0, 0, 1, 1], [], []>} : vector<8x512xf32>, vector<512x640xf32>, vector<8x640xf32> -> vector<8x640xf32>
    %27 = arith.addf %2, %26 : vector<8x640xf32>
    %c0_5 = arith.constant 0 : index
    %c0_6 = arith.constant 0 : index
    %28 = vector.load %arg3[%c0_5, %c0_6] : memref<8x1xf32, #tpu.memory_space<vmem>>, vector<8x1xf32>
    %29 = vector.broadcast %28 : vector<8x1xf32> to vector<8x640xf32>
    %30 = arith.addf %27, %29 : vector<8x640xf32>
    %cst_7 = arith.constant 0.000000e+00 : f32
    %31 = vector.broadcast %cst_7 : f32 to vector<8x640xf32>
    %32 = arith.maximumf %30, %31 : vector<8x640xf32>
    %33 = vector.extract_strided_slice %32 {offsets = [0, 0], sizes = [8, 512], strides = [1, 1]} : vector<8x640xf32> to vector<8x512xf32>
    %34 = vector.extract_strided_slice %32 {offsets = [0, 1], sizes = [8, 512], strides = [1, 1]} : vector<8x640xf32> to vector<8x512xf32>
    %35 = vector.extract_strided_slice %32 {offsets = [0, 16], sizes = [8, 512], strides = [1, 1]} : vector<8x640xf32> to vector<8x512xf32>
    %36 = vector.extract_strided_slice %32 {offsets = [0, 17], sizes = [8, 512], strides = [1, 1]} : vector<8x640xf32> to vector<8x512xf32>
    %37 = tpu.concatenate %33, %34, %35, %36 in 0 : vector<8x512xf32>, vector<8x512xf32>, vector<8x512xf32>, vector<8x512xf32> -> vector<32x512xf32>
    %c0_8 = arith.constant 0 : index
    %c0_9 = arith.constant 0 : index
    %38 = vector.load %arg4[%c0_8, %c0_9] : memref<16x32xf32, #tpu.memory_space<vmem>>, vector<16x32xf32>
    %cst_10 = arith.constant dense<0.000000e+00> : vector<16x512xf32>
    %39 = tpu.matmul %38, %37, %cst_10 {dimension_numbers = #tpu.dot_dimension_numbers<[1], [0], [0], [1], [0, 0, 1, 1], [], []>} : vector<16x32xf32>, vector<32x512xf32>, vector<16x512xf32> -> vector<16x512xf32>
    %c0_11 = arith.constant 0 : index
    %c0_12 = arith.constant 0 : index
    %40 = vector.load %arg5[%c0_11, %c0_12] : memref<16x1xf32, #tpu.memory_space<vmem>>, vector<16x1xf32>
    %41 = vector.broadcast %40 : vector<16x1xf32> to vector<16x512xf32>
    %42 = arith.addf %39, %41 : vector<16x512xf32>
    %cst_13 = arith.constant 0.000000e+00 : f32
    %43 = vector.broadcast %cst_13 : f32 to vector<16x512xf32>
    %44 = arith.maximumf %42, %43 : vector<16x512xf32>
    %45 = vector.extract_strided_slice %44 {offsets = [0, 0], sizes = [16, 256], strides = [1, 1]} : vector<16x512xf32> to vector<16x256xf32>
    %c0_14 = arith.constant 0 : index
    %c0_15 = arith.constant 0 : index
    %c0_16 = arith.constant 0 : index
    %46 = vector.load %arg6[%c0_14, %c0_15, %c0_16] : memref<2x16x256xf32, #tpu.memory_space<vmem>>, vector<1x16x256xf32>
    %47 = vector.shape_cast %46 : vector<1x16x256xf32> to vector<16x256xf32>
    %48 = vector.shape_cast %45 : vector<16x256xf32> to vector<1x16x256xf32>
    tpu.vector_store %arg6[%c0_14, %c0_15, %c0_16], %48 {strides = array<i32>} : memref<2x16x256xf32, #tpu.memory_space<vmem>>, vector<1x16x256xf32>,
    %49 = vector.extract_strided_slice %44 {offsets = [0, 256], sizes = [16, 256], strides = [1, 1]} : vector<16x512xf32> to vector<16x256xf32>
    %c1 = arith.constant 1 : index
    %c0_17 = arith.constant 0 : index
    %c0_18 = arith.constant 0 : index
    %50 = vector.load %arg6[%c1, %c0_17, %c0_18] : memref<2x16x256xf32, #tpu.memory_space<vmem>>, vector<1x16x256xf32>
    %51 = vector.shape_cast %50 : vector<1x16x256xf32> to vector<16x256xf32>
    %52 = vector.shape_cast %49 : vector<16x256xf32> to vector<1x16x256xf32>
    tpu.vector_store %arg6[%c1, %c0_17, %c0_18], %52 {strides = array<i32>} : memref<2x16x256xf32, #tpu.memory_space<vmem>>, vector<1x16x256xf32>,
    return
  }
  func.func @transform_0(%arg0: i32) -> (i32, i32) {
    %c0_i32 = arith.constant 0 : i32
    %c0_i32_0 = arith.constant 0 : i32
    %c0_i32_1 = arith.constant 0 : i32
    return %c0_i32, %c0_i32_0 : i32, i32
  }
  func.func @transform_1(%arg0: i32) -> (i32, i32, i32) {
    %c0_i32 = arith.constant 0 : i32
    %c0_i32_0 = arith.constant 0 : i32
    %c0_i32_1 = arith.constant 0 : i32
    %c0_i32_2 = arith.constant 0 : i32
    return %c0_i32, %c0_i32_0, %c0_i32_1 : i32, i32, i32
  }
  func.func @transform_2(%arg0: i32) -> (i32, i32) {
    %c0_i32 = arith.constant 0 : i32
    %c0_i32_0 = arith.constant 0 : i32
    %c0_i32_1 = arith.constant 0 : i32
    return %c0_i32, %c0_i32_0 : i32, i32
  }
  func.func @transform_3(%arg0: i32) -> (i32, i32) {
    %c0_i32 = arith.constant 0 : i32
    %c0_i32_0 = arith.constant 0 : i32
    %c0_i32_1 = arith.constant 0 : i32
    return %c0_i32, %c0_i32_0 : i32, i32
  }
  func.func @transform_4(%arg0: i32) -> (i32, i32) {
    %c0_i32 = arith.constant 0 : i32
    %c0_i32_0 = arith.constant 0 : i32
    %c0_i32_1 = arith.constant 0 : i32
    return %c0_i32, %c0_i32_0 : i32, i32
  }
  func.func @transform_5(%arg0: i32) -> (i32, i32, i32) {
    %c0_i32 = arith.constant 0 : i32
    %c0_i32_0 = arith.constant 0 : i32
    %c0_i32_1 = arith.constant 0 : i32
    %c0_i32_2 = arith.constant 0 : i32
    return %c0_i32, %c0_i32_0, %c0_i32_1 : i32, i32, i32
  }
}

</mosaic_0001>

<llo_original>
// kernel: extract_entities_forward.1
$region0: #{extract_entities_forward.1}
  #allocation0 [shape = 'u32[]', space=smem, size = 0x4, offset = 0x4, fixed_abs, tag = 'smem constant byte address 0x4 - core index']
  #allocation1 [shape = 'u32[144,128]{1,0:T(1,128)}', space=vmem, size = 0x12000, scoped, tag = 'internal scratch']
  %s0 = inlined_call_operand.vmem [shape: s32[4,640], index: 0, kind: input, shape index: {}]
  %s1 = inlined_call_operand.vmem [shape: f32[1,8,512], index: 1, kind: input, shape index: {}]
  %s2 = inlined_call_operand.vmem [shape: f32[8,1], index: 2, kind: input, shape index: {}]
  %s3 = inlined_call_operand.vmem [shape: f32[16,32], index: 3, kind: input, shape index: {}]
  %s4 = inlined_call_operand.vmem [shape: f32[16,1], index: 4, kind: input, shape index: {}]
  %s5 = inlined_call_operand.vmem [shape: f32[2,16,256], index: 5, kind: output, shape index: {}]
  %s6 = sld [smem:[#allocation0]]
  $region30: #{extract_entities_forward.1} parent=0
    _
  %s8 = ssub.s32 1, %s6
  %s9 = scalar_select 0, %s8, %s6
  // Predicated region
  $region2: #{extract_entities_forward.1} parent=0 // pred_check
    _
  $region3: #{extract_entities_forward.1} parent=0 // pred_check_branch
    %11 = sbr.rel (0) target = $region5
  $region4: #{extract_entities_forward.1} parent=0 // pred_region
    _
  $region5: #{extract_entities_forward.1} parent=0 // pred_fallthru
    _
  // Predicated region
  $region6: #{extract_entities_forward.1} parent=0 // pred_check
    _
  $region7: #{extract_entities_forward.1} parent=0 // pred_check_branch
    %13 = sbr.rel (0) target = $region9
  $region8: #{extract_entities_forward.1} parent=0 // pred_region
    _
  $region9: #{extract_entities_forward.1} parent=0 // pred_fallthru
    _
  // Predicated region
  $region10: #{extract_entities_forward.1} parent=0 // pred_check
    _
  $region11: #{extract_entities_forward.1} parent=0 // pred_check_branch
    %15 = sbr.rel (0) target = $region13
  $region12: #{extract_entities_forward.1} parent=0 // pred_region
    _
  $region13: #{extract_entities_forward.1} parent=0 // pred_fallthru
    _
  // Predicated region
  $region14: #{extract_entities_forward.1} parent=0 // pred_check
    _
  $region15: #{extract_entities_forward.1} parent=0 // pred_check_branch
    %17 = sbr.rel (0) target = $region17
  $region16: #{extract_entities_forward.1} parent=0 // pred_region
    _
  $region17: #{extract_entities_forward.1} parent=0 // pred_fallthru
    _
  // Predicated region
  $region18: #{extract_entities_forward.1} parent=0 // pred_check
    _
  $region19: #{extract_entities_forward.1} parent=0 // pred_check_branch
    %19 = sbr.rel (0) target = $region21
  $region20: #{extract_entities_forward.1} parent=0 // pred_region
    _
  $region21: #{extract_entities_forward.1} parent=0 // pred_fallthru
    _
  %v20 = vld [vmem:[%s0] sm:$0xff]
  %v21 = vld [vmem:[%s0 + $0x8] sm:$0xff]
  %v22 = vld [vmem:[%s0 + $0x10] sm:$0xf]
  %v23 = vlaneseq
  %v24 = vshrl.u32 %v23, 7
  %v25 = vadd.s32 %v24, 8
  %v26 = vadd.s32 %v24, 16
  %v27 = vadd.s32 %v24, 24
  %v28 = vadd.s32 %v24, 32
  %v29 = vadd.s32 %v24, 40
  %v30 = vadd.s32 %v24, 48
  %v31 = vadd.s32 %v24, 56
  %v32 = vadd.s32 %v24, 64
  %v33 = vadd.s32 %v24, 72
  %v34 = vadd.s32 %v24, 80
  %v35 = vadd.s32 %v24, 88
  %v36 = vadd.s32 %v24, 96
  %v37 = vadd.s32 %v24, 104
  %v38 = vadd.s32 %v24, 112
  %v39 = vadd.s32 %v24, 120
  %v40 = vlaneseq
  %v41 = vshrl.u32 %v40, 7
  %v42 = vsub.s32 0, %v41
  %v43 = vrot.slane %v20, %v42
  %v44 = vlaneseq
  %v45 = vshrl.u32 %v44, 7
  %v46 = vsub.s32 4, %v45
  %v47 = vrot.slane %v20, %v46
  %v48 = vlaneseq
  %v49 = vshrl.u32 %v48, 7
  %v50 = vsub.s32 0, %v49
  %v51 = vrot.slane %v21, %v50
  %v52 = vlaneseq
  %v53 = vshrl.u32 %v52, 7
  %v54 = vsub.s32 4, %v53
  %v55 = vrot.slane %v21, %v54
  %v56 = vlaneseq
  %v57 = vshrl.u32 %v56, 7
  %v58 = vsub.s32 0, %v57
  %v59 = vrot.slane %v22, %v58
  %v60 = vlaneseq
  %v61 = vshrl.u32 %v60, 7
  %v62 = vsub.s32 0, %v61
  %v63 = vrot.slane %v43, %v62
  %v64 = vlaneseq
  %v65 = vshrl.u32 %v64, 7
  %v66 = vsub.s32 0, %v65
  %v67 = vrot.slane %v47, %v66
  %v68 = vlaneseq
  %v69 = vshrl.u32 %v68, 7
  %v70 = vsub.s32 0, %v69
  %v71 = vrot.slane %v51, %v70
  %v72 = vlaneseq
  %v73 = vshrl.u32 %v72, 7
  %v74 = vsub.s32 0, %v73
  %v75 = vrot.slane %v55, %v74
  %v76 = vlaneseq
  %v77 = vshrl.u32 %v76, 7
  %v78 = vsub.s32 0, %v77
  %v79 = vrot.slane %v59, %v78
  %vm80 = vcmp.eq.s32.totalorder %v24, %v63
  %vm81 = vcmp.eq.s32.totalorder %v24, %v67
  %vm82 = vcmp.eq.s32.totalorder %v24, %v71
  %vm83 = vcmp.eq.s32.totalorder %v24, %v75
  %vm84 = vcmp.eq.s32.totalorder %v24, %v79
  %vm85 = vcmp.eq.s32.totalorder %v25, %v63
  %vm86 = vcmp.eq.s32.totalorder %v25, %v67
  %vm87 = vcmp.eq.s32.totalorder %v25, %v71
  %vm88 = vcmp.eq.s32.totalorder %v25, %v75
  %vm89 = vcmp.eq.s32.totalorder %v25, %v79
  %vm90 = vcmp.eq.s32.totalorder %v26, %v63
  %vm91 = vcmp.eq.s32.totalorder %v26, %v67
  %vm92 = vcmp.eq.s32.totalorder %v26, %v71
  %vm93 = vcmp.eq.s32.totalorder %v26, %v75
  %vm94 = vcmp.eq.s32.totalorder %v26, %v79
  %vm95 = vcmp.eq.s32.totalorder %v27, %v63
  %vm96 = vcmp.eq.s32.totalorder %v27, %v67
  %vm97 = vcmp.eq.s32.totalorder %v27, %v71
  %vm98 = vcmp.eq.s32.totalorder %v27, %v75
  %vm99 = vcmp.eq.s32.totalorder %v27, %v79
  %vm100 = vcmp.eq.s32.totalorder %v28, %v63
  %vm101 = vcmp.eq.s32.totalorder %v28, %v67
  %vm102 = vcmp.eq.s32.totalorder %v28, %v71
  %vm103 = vcmp.eq.s32.totalorder %v28, %v75
  %vm104 = vcmp.eq.s32.totalorder %v28, %v79
  %vm105 = vcmp.eq.s32.totalorder %v29, %v63
  %vm106 = vcmp.eq.s32.totalorder %v29, %v67
  %vm107 = vcmp.eq.s32.totalorder %v29, %v71
  %vm108 = vcmp.eq.s32.totalorder %v29, %v75
  %vm109 = vcmp.eq.s32.totalorder %v29, %v79
  %vm110 = vcmp.eq.s32.totalorder %v30, %v63
  %vm111 = vcmp.eq.s32.totalorder %v30, %v67
  %vm112 = vcmp.eq.s32.totalorder %v30, %v71
  %vm113 = vcmp.eq.s32.totalorder %v30, %v75
  %vm114 = vcmp.eq.s32.totalorder %v30, %v79
  %vm115 = vcmp.eq.s32.totalorder %v31, %v63
  %vm116 = vcmp.eq.s32.totalorder %v31, %v67
  %vm117 = vcmp.eq.s32.totalorder %v31, %v71
  %vm118 = vcmp.eq.s32.totalorder %v31, %v75
  %vm119 = vcmp.eq.s32.totalorder %v31, %v79
  %vm120 = vcmp.eq.s32.totalorder %v32, %v63
  %vm121 = vcmp.eq.s32.totalorder %v32, %v67
  %vm122 = vcmp.eq.s32.totalorder %v32, %v71
  %vm123 = vcmp.eq.s32.totalorder %v32, %v75
  %vm124 = vcmp.eq.s32.totalorder %v32, %v79
  %vm125 = vcmp.eq.s32.totalorder %v33, %v63
  %vm126 = vcmp.eq.s32.totalorder %v33, %v67
  %vm127 = vcmp.eq.s32.totalorder %v33, %v71
  %vm128 = vcmp.eq.s32.totalorder %v33, %v75
  %vm129 = vcmp.eq.s32.totalorder %v33, %v79
  %vm130 = vcmp.eq.s32.totalorder %v34, %v63
  %vm131 = vcmp.eq.s32.totalorder %v34, %v67
  %vm132 = vcmp.eq.s32.totalorder %v34, %v71
  %vm133 = vcmp.eq.s32.totalorder %v34, %v75
  %vm134 = vcmp.eq.s32.totalorder %v34, %v79
  %vm135 = vcmp.eq.s32.totalorder %v35, %v63
  %vm136 = vcmp.eq.s32.totalorder %v35, %v67
  %vm137 = vcmp.eq.s32.totalorder %v35, %v71
  %vm138 = vcmp.eq.s32.totalorder %v35, %v75
  %vm139 = vcmp.eq.s32.totalorder %v35, %v79
  %vm140 = vcmp.eq.s32.totalorder %v36, %v63
  %vm141 = vcmp.eq.s32.totalorder %v36, %v67
  %vm142 = vcmp.eq.s32.totalorder %v36, %v71
  %vm143 = vcmp.eq.s32.totalorder %v36, %v75
  %vm144 = vcmp.eq.s32.totalorder %v36, %v79
  %vm145 = vcmp.eq.s32.totalorder %v37, %v63
  %vm146 = vcmp.eq.s32.totalorder %v37, %v67
  %vm147 = vcmp.eq.s32.totalorder %v37, %v71
  %vm148 = vcmp.eq.s32.totalorder %v37, %v75
  %vm149 = vcmp.eq.s32.totalorder %v37, %v79
  %vm150 = vcmp.eq.s32.totalorder %v38, %v63
  %vm151 = vcmp.eq.s32.totalorder %v38, %v67
  %vm152 = vcmp.eq.s32.totalorder %v38, %v71
  %vm153 = vcmp.eq.s32.totalorder %v38, %v75
  %vm154 = vcmp.eq.s32.totalorder %v38, %v79
  %vm155 = vcmp.eq.s32.totalorder %v39, %v63
  %vm156 = vcmp.eq.s32.totalorder %v39, %v67
  %vm157 = vcmp.eq.s32.totalorder %v39, %v71
  %vm158 = vcmp.eq.s32.totalorder %v39, %v75
  %vm159 = vcmp.eq.s32.totalorder %v39, %v79
  %v160 = vsel %vm80, 1, 0
  %v161 = vsel %vm81, 1, 0
  %v162 = vsel %vm82, 1, 0
  %v163 = vsel %vm83, 1, 0
  %v164 = vsel %vm84, 1, 0
  %v165 = vsel %vm85, 1, 0
  %v166 = vsel %vm86, 1, 0
  %v167 = vsel %vm87, 1, 0
  %v168 = vsel %vm88, 1, 0
  %v169 = vsel %vm89, 1, 0
  %v170 = vsel %vm90, 1, 0
  %v171 = vsel %vm91, 1, 0
  %v172 = vsel %vm92, 1, 0
  %v173 = vsel %vm93, 1, 0
  %v174 = vsel %vm94, 1, 0
  %v175 = vsel %vm95, 1, 0
  %v176 = vsel %vm96, 1, 0
  %v177 = vsel %vm97, 1, 0
  %v178 = vsel %vm98, 1, 0
  %v179 = vsel %vm99, 1, 0
  %v180 = vsel %vm100, 1, 0
  %v181 = vsel %vm101, 1, 0
  %v182 = vsel %vm102, 1, 0
  %v183 = vsel %vm103, 1, 0
  %v184 = vsel %vm104, 1, 0
  %v185 = vsel %vm105, 1, 0
  %v186 = vsel %vm106, 1, 0
  %v187 = vsel %vm107, 1, 0
  %v188 = vsel %vm108, 1, 0
  %v189 = vsel %vm109, 1, 0
  %v190 = vsel %vm110, 1, 0
  %v191 = vsel %vm111, 1, 0
  %v192 = vsel %vm112, 1, 0
  %v193 = vsel %vm113, 1, 0
  %v194 = vsel %vm114, 1, 0
  %v195 = vsel %vm115, 1, 0
  %v196 = vsel %vm116, 1, 0
  %v197 = vsel %vm117, 1, 0
  %v198 = vsel %vm118, 1, 0
  %v199 = vsel %vm119, 1, 0
  %v200 = vsel %vm120, 1, 0
  %v201 = vsel %vm121, 1, 0
  %v202 = vsel %vm122, 1, 0
  %v203 = vsel %vm123, 1, 0
  %v204 = vsel %vm124, 1, 0
  %v205 = vsel %vm125, 1, 0
  %v206 = vsel %vm126, 1, 0
  %v207 = vsel %vm127, 1, 0
  %v208 = vsel %vm128, 1, 0
  %v209 = vsel %vm129, 1, 0
  %v210 = vsel %vm130, 1, 0
  %v211 = vsel %vm131, 1, 0
  %v212 = vsel %vm132, 1, 0
  %v213 = vsel %vm133, 1, 0
  %v214 = vsel %vm134, 1, 0
  %v215 = vsel %vm135, 1, 0
  %v216 = vsel %vm136, 1, 0
  %v217 = vsel %vm137, 1, 0
  %v218 = vsel %vm138, 1, 0
  %v219 = vsel %vm139, 1, 0
  %v220 = vsel %vm140, 1, 0
  %v221 = vsel %vm141, 1, 0
  %v222 = vsel %vm142, 1, 0
  %v223 = vsel %vm143, 1, 0
  %v224 = vsel %vm144, 1, 0
  %v225 = vsel %vm145, 1, 0
  %v226 = vsel %vm146, 1, 0
  %v227 = vsel %vm147, 1, 0
  %v228 = vsel %vm148, 1, 0
  %v229 = vsel %vm149, 1, 0
  %v230 = vsel %vm150, 1, 0
  %v231 = vsel %vm151, 1, 0
  %v232 = vsel %vm152, 1, 0
  %v233 = vsel %vm153, 1, 0
  %v234 = vsel %vm154, 1, 0
  %v235 = vsel %vm155, 1, 0
  %v236 = vsel %vm156, 1, 0
  %v237 = vsel %vm157, 1, 0
  %v238 = vsel %vm158, 1, 0
  %v239 = vsel %vm159, 1, 0
  %v240 = vcvt.s32.f32 %v160
  %v241 = vcvt.s32.f32 %v161
  %v242 = vcvt.s32.f32 %v162
  %v243 = vcvt.s32.f32 %v163
  %v244 = vcvt.s32.f32 %v164
  %v245 = vcvt.s32.f32 %v165
  %v246 = vcvt.s32.f32 %v166
  %v247 = vcvt.s32.f32 %v167
  %v248 = vcvt.s32.f32 %v168
  %v249 = vcvt.s32.f32 %v169
  %v250 = vcvt.s32.f32 %v170
  %v251 = vcvt.s32.f32 %v171
  %v252 = vcvt.s32.f32 %v172
  %v253 = vcvt.s32.f32 %v173
  %v254 = vcvt.s32.f32 %v174
  %v255 = vcvt.s32.f32 %v175
  %v256 = vcvt.s32.f32 %v176
  %v257 = vcvt.s32.f32 %v177
  %v258 = vcvt.s32.f32 %v178
  %v259 = vcvt.s32.f32 %v179
  %v260 = vcvt.s32.f32 %v180
  %v261 = vcvt.s32.f32 %v181
  %v262 = vcvt.s32.f32 %v182
  %v263 = vcvt.s32.f32 %v183
  %v264 = vcvt.s32.f32 %v184
  %v265 = vcvt.s32.f32 %v185
  %v266 = vcvt.s32.f32 %v186
  %v267 = vcvt.s32.f32 %v187
  %v268 = vcvt.s32.f32 %v188
  %v269 = vcvt.s32.f32 %v189
  %v270 = vcvt.s32.f32 %v190
  %v271 = vcvt.s32.f32 %v191
  %v272 = vcvt.s32.f32 %v192
  %v273 = vcvt.s32.f32 %v193
  %v274 = vcvt.s32.f32 %v194
  %v275 = vcvt.s32.f32 %v195
  %v276 = vcvt.s32.f32 %v196
  %v277 = vcvt.s32.f32 %v197
  %v278 = vcvt.s32.f32 %v198
  %v279 = vcvt.s32.f32 %v199
  %v280 = vcvt.s32.f32 %v200
  %v281 = vcvt.s32.f32 %v201
  %v282 = vcvt.s32.f32 %v202
  %v283 = vcvt.s32.f32 %v203
  %v284 = vcvt.s32.f32 %v204
  %v285 = vcvt.s32.f32 %v205
  %v286 = vcvt.s32.f32 %v206
  %v287 = vcvt.s32.f32 %v207
  %v288 = vcvt.s32.f32 %v208
  %v289 = vcvt.s32.f32 %v209
  %v290 = vcvt.s32.f32 %v210
  %v291 = vcvt.s32.f32 %v211
  %v292 = vcvt.s32.f32 %v212
  %v293 = vcvt.s32.f32 %v213
  %v294 = vcvt.s32.f32 %v214
  %v295 = vcvt.s32.f32 %v215
  %v296 = vcvt.s32.f32 %v216
  %v297 = vcvt.s32.f32 %v217
  %v298 = vcvt.s32.f32 %v218
  %v299 = vcvt.s32.f32 %v219
  %v300 = vcvt.s32.f32 %v220
  %v301 = vcvt.s32.f32 %v221
  %v302 = vcvt.s32.f32 %v222
  %v303 = vcvt.s32.f32 %v223
  %v304 = vcvt.s32.f32 %v224
  %v305 = vcvt.s32.f32 %v225
  %v306 = vcvt.s32.f32 %v226
  %v307 = vcvt.s32.f32 %v227
  %v308 = vcvt.s32.f32 %v228
  %v309 = vcvt.s32.f32 %v229
  %v310 = vcvt.s32.f32 %v230
  %v311 = vcvt.s32.f32 %v231
  %v312 = vcvt.s32.f32 %v232
  %v313 = vcvt.s32.f32 %v233
  %v314 = vcvt.s32.f32 %v234
  %v315 = vcvt.s32.f32 %v235
  %v316 = vcvt.s32.f32 %v236
  %v317 = vcvt.s32.f32 %v237
  %v318 = vcvt.s32.f32 %v238
  %v319 = vcvt.s32.f32 %v239
  %v320 = vlaneseq
  %v321 = vshrl.u32 %v320, 7
  %v322 = vsub.s32 1, %v321
  %v323 = vrot.slane %v20, %v322
  %v324 = vlaneseq
  %v325 = vshrl.u32 %v324, 7
  %v326 = vsub.s32 5, %v325
  %v327 = vrot.slane %v20, %v326
  %v328 = vlaneseq
  %v329 = vshrl.u32 %v328, 7
  %v330 = vsub.s32 1, %v329
  %v331 = vrot.slane %v21, %v330
  %v332 = vlaneseq
  %v333 = vshrl.u32 %v332, 7
  %v334 = vsub.s32 5, %v333
  %v335 = vrot.slane %v21, %v334
  %v336 = vlaneseq
  %v337 = vshrl.u32 %v336, 7
  %v338 = vsub.s32 1, %v337
  %v339 = vrot.slane %v22, %v338
  %v340 = vlaneseq
  %v341 = vshrl.u32 %v340, 7
  %v342 = vsub.s32 1, %v341
  %v343 = vrot.slane %v323, %v342
  %v344 = vlaneseq
  %v345 = vshrl.u32 %v344, 7
  %v346 = vsub.s32 1, %v345
  %v347 = vrot.slane %v327, %v346
  %v348 = vlaneseq
  %v349 = vshrl.u32 %v348, 7
  %v350 = vsub.s32 1, %v349
  %v351 = vrot.slane %v331, %v350
  %v352 = vlaneseq
  %v353 = vshrl.u32 %v352, 7
  %v354 = vsub.s32 1, %v353
  %v355 = vrot.slane %v335, %v354
  %v356 = vlaneseq
  %v357 = vshrl.u32 %v356, 7
  %v358 = vsub.s32 1, %v357
  %v359 = vrot.slane %v339, %v358
  %vm360 = vcmp.eq.s32.totalorder %v24, %v343
  %vm361 = vcmp.eq.s32.totalorder %v24, %v347
  %vm362 = vcmp.eq.s32.totalorder %v24, %v351
  %vm363 = vcmp.eq.s32.totalorder %v24, %v355
  %vm364 = vcmp.eq.s32.totalorder %v24, %v359
  %vm365 = vcmp.eq.s32.totalorder %v25, %v343
  %vm366 = vcmp.eq.s32.totalorder %v25, %v347
  %vm367 = vcmp.eq.s32.totalorder %v25, %v351
  %vm368 = vcmp.eq.s32.totalorder %v25, %v355
  %vm369 = vcmp.eq.s32.totalorder %v25, %v359
  %vm370 = vcmp.eq.s32.totalorder %v26, %v343
  %vm371 = vcmp.eq.s32.totalorder %v26, %v347
  %vm372 = vcmp.eq.s32.totalorder %v26, %v351
  %vm373 = vcmp.eq.s32.totalorder %v26, %v355
  %vm374 = vcmp.eq.s32.totalorder %v26, %v359
  %vm375 = vcmp.eq.s32.totalorder %v27, %v343
  %vm376 = vcmp.eq.s32.totalorder %v27, %v347
  %vm377 = vcmp.eq.s32.totalorder %v27, %v351
  %vm378 = vcmp.eq.s32.totalorder %v27, %v355
  %vm379 = vcmp.eq.s32.totalorder %v27, %v359
  %vm380 = vcmp.eq.s32.totalorder %v28, %v343
  %vm381 = vcmp.eq.s32.totalorder %v28, %v347
  %vm382 = vcmp.eq.s32.totalorder %v28, %v351
  %vm383 = vcmp.eq.s32.totalorder %v28, %v355
  %vm384 = vcmp.eq.s32.totalorder %v28, %v359
  %vm385 = vcmp.eq.s32.totalorder %v29, %v343
  %vm386 = vcmp.eq.s32.totalorder %v29, %v347
  %vm387 = vcmp.eq.s32.totalorder %v29, %v351
  %vm388 = vcmp.eq.s32.totalorder %v29, %v355
  %vm389 = vcmp.eq.s32.totalorder %v29, %v359
  %vm390 = vcmp.eq.s32.totalorder %v30, %v343
  %vm391 = vcmp.eq.s32.totalorder %v30, %v347
  %vm392 = vcmp.eq.s32.totalorder %v30, %v351
  %vm393 = vcmp.eq.s32.totalorder %v30, %v355
  %vm394 = vcmp.eq.s32.totalorder %v30, %v359
  %vm395 = vcmp.eq.s32.totalorder %v31, %v343
  %vm396 = vcmp.eq.s32.totalorder %v31, %v347
  %vm397 = vcmp.eq.s32.totalorder %v31, %v351
  %vm398 = vcmp.eq.s32.totalorder %v31, %v355
  %vm399 = vcmp.eq.s32.totalorder %v31, %v359
  %vm400 = vcmp.eq.s32.totalorder %v32, %v343
  %vm401 = vcmp.eq.s32.totalorder %v32, %v347
  %vm402 = vcmp.eq.s32.totalorder %v32, %v351
  %vm403 = vcmp.eq.s32.totalorder %v32, %v355
  %vm404 = vcmp.eq.s32.totalorder %v32, %v359
  %vm405 = vcmp.eq.s32.totalorder %v33, %v343
  %vm406 = vcmp.eq.s32.totalorder %v33, %v347
  %vm407 = vcmp.eq.s32.totalorder %v33, %v351
  %vm408 = vcmp.eq.s32.totalorder %v33, %v355
  %vm409 = vcmp.eq.s32.totalorder %v33, %v359
  %vm410 = vcmp.eq.s32.totalorder %v34, %v343
  %vm411 = vcmp.eq.s32.totalorder %v34, %v347
  %vm412 = vcmp.eq.s32.totalorder %v34, %v351
  %vm413 = vcmp.eq.s32.totalorder %v34, %v355
  %vm414 = vcmp.eq.s32.totalorder %v34, %v359
  %vm415 = vcmp.eq.s32.totalorder %v35, %v343
  %vm416 = vcmp.eq.s32.totalorder %v35, %v347
  %vm417 = vcmp.eq.s32.totalorder %v35, %v351
  %vm418 = vcmp.eq.s32.totalorder %v35, %v355
  %vm419 = vcmp.eq.s32.totalorder %v35, %v359
  %vm420 = vcmp.eq.s32.totalorder %v36, %v343
  %vm421 = vcmp.eq.s32.totalorder %v36, %v347
  %vm422 = vcmp.eq.s32.totalorder %v36, %v351
  %vm423 = vcmp.eq.s32.totalorder %v36, %v355
  %vm424 = vcmp.eq.s32.totalorder %v36, %v359
  %vm425 = vcmp.eq.s32.totalorder %v37, %v343
  %vm426 = vcmp.eq.s32.totalorder %v37, %v347
  %vm427 = vcmp.eq.s32.totalorder %v37, %v351
  %vm428 = vcmp.eq.s32.totalorder %v37, %v355
  %vm429 = vcmp.eq.s32.totalorder %v37, %v359
  %vm430 = vcmp.eq.s32.totalorder %v38, %v343
  %vm431 = vcmp.eq.s32.totalorder %v38, %v347
  %vm432 = vcmp.eq.s32.totalorder %v38, %v351
  %vm433 = vcmp.eq.s32.totalorder %v38, %v355
  %vm434 = vcmp.eq.s32.totalorder %v38, %v359
  %vm435 = vcmp.eq.s32.totalorder %v39, %v343
  %vm436 = vcmp.eq.s32.totalorder %v39, %v347
  %vm437 = vcmp.eq.s32.totalorder %v39, %v351
  %vm438 = vcmp.eq.s32.totalorder %v39, %v355
  %vm439 = vcmp.eq.s32.totalorder %v39, %v359
  %v440 = vsel %vm360, 1, 0
  %v441 = vsel %vm361, 1, 0
  %v442 = vsel %vm362, 1, 0
  %v443 = vsel %vm363, 1, 0
  %v444 = vsel %vm364, 1, 0
  %v445 = vsel %vm365, 1, 0
  %v446 = vsel %vm366, 1, 0
  %v447 = vsel %vm367, 1, 0
  %v448 = vsel %vm368, 1, 0
  %v449 = vsel %vm369, 1, 0
  %v450 = vsel %vm370, 1, 0
  %v451 = vsel %vm371, 1, 0
  %v452 = vsel %vm372, 1, 0
  %v453 = vsel %vm373, 1, 0
  %v454 = vsel %vm374, 1, 0
  %v455 = vsel %vm375, 1, 0
  %v456 = vsel %vm376, 1, 0
  %v457 = vsel %vm377, 1, 0
  %v458 = vsel %vm378, 1, 0
  %v459 = vsel %vm379, 1, 0
  %v460 = vsel %vm380, 1, 0
  %v461 = vsel %vm381, 1, 0
  %v462 = vsel %vm382, 1, 0
  %v463 = vsel %vm383, 1, 0
  %v464 = vsel %vm384, 1, 0
  %v465 = vsel %vm385, 1, 0
  %v466 = vsel %vm386, 1, 0
  %v467 = vsel %vm387, 1, 0
  %v468 = vsel %vm388, 1, 0
  %v469 = vsel %vm389, 1, 0
  %v470 = vsel %vm390, 1, 0
  %v471 = vsel %vm391, 1, 0
  %v472 = vsel %vm392, 1, 0
  %v473 = vsel %vm393, 1, 0
  %v474 = vsel %vm394, 1, 0
  %v475 = vsel %vm395, 1, 0
  %v476 = vsel %vm396, 1, 0
  %v477 = vsel %vm397, 1, 0
  %v478 = vsel %vm398, 1, 0
  %v479 = vsel %vm399, 1, 0
  %v480 = vsel %vm400, 1, 0
  %v481 = vsel %vm401, 1, 0
  %v482 = vsel %vm402, 1, 0
  %v483 = vsel %vm403, 1, 0
  %v484 = vsel %vm404, 1, 0
  %v485 = vsel %vm405, 1, 0
  %v486 = vsel %vm406, 1, 0
  %v487 = vsel %vm407, 1, 0
  %v488 = vsel %vm408, 1, 0
  %v489 = vsel %vm409, 1, 0
  %v490 = vsel %vm410, 1, 0
  %v491 = vsel %vm411, 1, 0
  %v492 = vsel %vm412, 1, 0
  %v493 = vsel %vm413, 1, 0
  %v494 = vsel %vm414, 1, 0
  %v495 = vsel %vm415, 1, 0
  %v496 = vsel %vm416, 1, 0
  %v497 = vsel %vm417, 1, 0
  %v498 = vsel %vm418, 1, 0
  %v499 = vsel %vm419, 1, 0
  %v500 = vsel %vm420, 1, 0
  %v501 = vsel %vm421, 1, 0
  %v502 = vsel %vm422, 1, 0
  %v503 = vsel %vm423, 1, 0
  %v504 = vsel %vm424, 1, 0
  %v505 = vsel %vm425, 1, 0
  %v506 = vsel %vm426, 1, 0
  %v507 = vsel %vm427, 1, 0
  %v508 = vsel %vm428, 1, 0
  %v509 = vsel %vm429, 1, 0
  %v510 = vsel %vm430, 1, 0
  %v511 = vsel %vm431, 1, 0
  %v512 = vsel %vm432, 1, 0
  %v513 = vsel %vm433, 1, 0
  %v514 = vsel %vm434, 1, 0
  %v515 = vsel %vm435, 1, 0
  %v516 = vsel %vm436, 1, 0
  %v517 = vsel %vm437, 1, 0
  %v518 = vsel %vm438, 1, 0
  %v519 = vsel %vm439, 1, 0
  %v520 = vcvt.s32.f32 %v440
  %v521 = vcvt.s32.f32 %v441
  %v522 = vcvt.s32.f32 %v442
  %v523 = vcvt.s32.f32 %v443
  %v524 = vcvt.s32.f32 %v444
  %v525 = vcvt.s32.f32 %v445
  %v526 = vcvt.s32.f32 %v446
  %v527 = vcvt.s32.f32 %v447
  %v528 = vcvt.s32.f32 %v448
  %v529 = vcvt.s32.f32 %v449
  %v530 = vcvt.s32.f32 %v450
  %v531 = vcvt.s32.f32 %v451
  %v532 = vcvt.s32.f32 %v452
  %v533 = vcvt.s32.f32 %v453
  %v534 = vcvt.s32.f32 %v454
  %v535 = vcvt.s32.f32 %v455
  %v536 = vcvt.s32.f32 %v456
  %v537 = vcvt.s32.f32 %v457
  %v538 = vcvt.s32.f32 %v458
  %v539 = vcvt.s32.f32 %v459
  %v540 = vcvt.s32.f32 %v460
  %v541 = vcvt.s32.f32 %v461
  %v542 = vcvt.s32.f32 %v462
  %v543 = vcvt.s32.f32 %v463
  %v544 = vcvt.s32.f32 %v464
  %v545 = vcvt.s32.f32 %v465
  %v546 = vcvt.s32.f32 %v466
  %v547 = vcvt.s32.f32 %v467
  %v548 = vcvt.s32.f32 %v468
  %v549 = vcvt.s32.f32 %v469
  %v550 = vcvt.s32.f32 %v470
  %v551 = vcvt.s32.f32 %v471
  %v552 = vcvt.s32.f32 %v472
  %v553 = vcvt.s32.f32 %v473
  %v554 = vcvt.s32.f32 %v474
  %v555 = vcvt.s32.f32 %v475
  %v556 = vcvt.s32.f32 %v476
  %v557 = vcvt.s32.f32 %v477
  %v558 = vcvt.s32.f32 %v478
  %v559 = vcvt.s32.f32 %v479
  %v560 = vcvt.s32.f32 %v480
  %v561 = vcvt.s32.f32 %v481
  %v562 = vcvt.s32.f32 %v482
  %v563 = vcvt.s32.f32 %v483
  %v564 = vcvt.s32.f32 %v484
  %v565 = vcvt.s32.f32 %v485
  %v566 = vcvt.s32.f32 %v486
  %v567 = vcvt.s32.f32 %v487
  %v568 = vcvt.s32.f32 %v488
  %v569 = vcvt.s32.f32 %v489
  %v570 = vcvt.s32.f32 %v490
  %v571 = vcvt.s32.f32 %v491
  %v572 = vcvt.s32.f32 %v492
  %v573 = vcvt.s32.f32 %v493
  %v574 = vcvt.s32.f32 %v494
  %v575 = vcvt.s32.f32 %v495
  %v576 = vcvt.s32.f32 %v496
  %v577 = vcvt.s32.f32 %v497
  %v578 = vcvt.s32.f32 %v498
  %v579 = vcvt.s32.f32 %v499
  %v580 = vcvt.s32.f32 %v500
  %v581 = vcvt.s32.f32 %v501
  %v582 = vcvt.s32.f32 %v502
  %v583 = vcvt.s32.f32 %v503
  %v584 = vcvt.s32.f32 %v504
  %v585 = vcvt.s32.f32 %v505
  %v586 = vcvt.s32.f32 %v506
  %v587 = vcvt.s32.f32 %v507
  %v588 = vcvt.s32.f32 %v508
  %v589 = vcvt.s32.f32 %v509
  %v590 = vcvt.s32.f32 %v510
  %v591 = vcvt.s32.f32 %v511
  %v592 = vcvt.s32.f32 %v512
  %v593 = vcvt.s32.f32 %v513
  %v594 = vcvt.s32.f32 %v514
  %v595 = vcvt.s32.f32 %v515
  %v596 = vcvt.s32.f32 %v516
  %v597 = vcvt.s32.f32 %v517
  %v598 = vcvt.s32.f32 %v518
  %v599 = vcvt.s32.f32 %v519
  %v600 = vlaneseq
  %v601 = vshrl.u32 %v600, 7
  %v602 = vsub.s32 2, %v601
  %v603 = vrot.slane %v20, %v602
  %v604 = vlaneseq
  %v605 = vshrl.u32 %v604, 7
  %v606 = vsub.s32 6, %v605
  %v607 = vrot.slane %v20, %v606
  %v608 = vlaneseq
  %v609 = vshrl.u32 %v608, 7
  %v610 = vsub.s32 2, %v609
  %v611 = vrot.slane %v21, %v610
  %v612 = vlaneseq
  %v613 = vshrl.u32 %v612, 7
  %v614 = vsub.s32 6, %v613
  %v615 = vrot.slane %v21, %v614
  %v616 = vlaneseq
  %v617 = vshrl.u32 %v616, 7
  %v618 = vsub.s32 2, %v617
  %v619 = vrot.slane %v22, %v618
  %v620 = vlaneseq
  %v621 = vshrl.u32 %v620, 7
  %v622 = vsub.s32 2, %v621
  %v623 = vrot.slane %v603, %v622
  %v624 = vlaneseq
  %v625 = vshrl.u32 %v624, 7
  %v626 = vsub.s32 2, %v625
  %v627 = vrot.slane %v607, %v626
  %v628 = vlaneseq
  %v629 = vshrl.u32 %v628, 7
  %v630 = vsub.s32 2, %v629
  %v631 = vrot.slane %v611, %v630
  %v632 = vlaneseq
  %v633 = vshrl.u32 %v632, 7
  %v634 = vsub.s32 2, %v633
  %v635 = vrot.slane %v615, %v634
  %v636 = vlaneseq
  %v637 = vshrl.u32 %v636, 7
  %v638 = vsub.s32 2, %v637
  %v639 = vrot.slane %v619, %v638
  %vm640 = vcmp.eq.s32.totalorder %v24, %v623
  %vm641 = vcmp.eq.s32.totalorder %v24, %v627
  %vm642 = vcmp.eq.s32.totalorder %v24, %v631
  %vm643 = vcmp.eq.s32.totalorder %v24, %v635
  %vm644 = vcmp.eq.s32.totalorder %v24, %v639
  %vm645 = vcmp.eq.s32.totalorder %v25, %v623
  %vm646 = vcmp.eq.s32.totalorder %v25, %v627
  %vm647 = vcmp.eq.s32.totalorder %v25, %v631
  %vm648 = vcmp.eq.s32.totalorder %v25, %v635
  %vm649 = vcmp.eq.s32.totalorder %v25, %v639
  %vm650 = vcmp.eq.s32.totalorder %v26, %v623
  %vm651 = vcmp.eq.s32.totalorder %v26, %v627
  %vm652 = vcmp.eq.s32.totalorder %v26, %v631
  %vm653 = vcmp.eq.s32.totalorder %v26, %v635
  %vm654 = vcmp.eq.s32.totalorder %v26, %v639
  %vm655 = vcmp.eq.s32.totalorder %v27, %v623
  %vm656 = vcmp.eq.s32.totalorder %v27, %v627
  %vm657 = vcmp.eq.s32.totalorder %v27, %v631
  %vm658 = vcmp.eq.s32.totalorder %v27, %v635
  %vm659 = vcmp.eq.s32.totalorder %v27, %v639
  %vm660 = vcmp.eq.s32.totalorder %v28, %v623
  %vm661 = vcmp.eq.s32.totalorder %v28, %v627
  %vm662 = vcmp.eq.s32.totalorder %v28, %v631
  %vm663 = vcmp.eq.s32.totalorder %v28, %v635
  %vm664 = vcmp.eq.s32.totalorder %v28, %v639
  %vm665 = vcmp.eq.s32.totalorder %v29, %v623
  %vm666 = vcmp.eq.s32.totalorder %v29, %v627
  %vm667 = vcmp.eq.s32.totalorder %v29, %v631
  %vm668 = vcmp.eq.s32.totalorder %v29, %v635
  %vm669 = vcmp.eq.s32.totalorder %v29, %v639
  %vm670 = vcmp.eq.s32.totalorder %v30, %v623
  %vm671 = vcmp.eq.s32.totalorder %v30, %v627
  %vm672 = vcmp.eq.s32.totalorder %v30, %v631
  %vm673 = vcmp.eq.s32.totalorder %v30, %v635
  %vm674 = vcmp.eq.s32.totalorder %v30, %v639
  %vm675 = vcmp.eq.s32.totalorder %v31, %v623
  %vm676 = vcmp.eq.s32.totalorder %v31, %v627
  %vm677 = vcmp.eq.s32.totalorder %v31, %v631
  %vm678 = vcmp.eq.s32.totalorder %v31, %v635
  %vm679 = vcmp.eq.s32.totalorder %v31, %v639
  %vm680 = vcmp.eq.s32.totalorder %v32, %v623
  %vm681 = vcmp.eq.s32.totalorder %v32, %v627
  %vm682 = vcmp.eq.s32.totalorder %v32, %v631
  %vm683 = vcmp.eq.s32.totalorder %v32, %v635
  %vm684 = vcmp.eq.s32.totalorder %v32, %v639
  %vm685 = vcmp.eq.s32.totalorder %v33, %v623
  %vm686 = vcmp.eq.s32.totalorder %v33, %v627
  %vm687 = vcmp.eq.s32.totalorder %v33, %v631
  %vm688 = vcmp.eq.s32.totalorder %v33, %v635
  %vm689 = vcmp.eq.s32.totalorder %v33, %v639
  %vm690 = vcmp.eq.s32.totalorder %v34, %v623
  %vm691 = vcmp.eq.s32.totalorder %v34, %v627
  %vm692 = vcmp.eq.s32.totalorder %v34, %v631
  %vm693 = vcmp.eq.s32.totalorder %v34, %v635
  %vm694 = vcmp.eq.s32.totalorder %v34, %v639
  %vm695 = vcmp.eq.s32.totalorder %v35, %v623
  %vm696 = vcmp.eq.s32.totalorder %v35, %v627
  %vm697 = vcmp.eq.s32.totalorder %v35, %v631
  %vm698 = vcmp.eq.s32.totalorder %v35, %v635
  %vm699 = vcmp.eq.s32.totalorder %v35, %v639
  %vm700 = vcmp.eq.s32.totalorder %v36, %v623
  %vm701 = vcmp.eq.s32.totalorder %v36, %v627
  %vm702 = vcmp.eq.s32.totalorder %v36, %v631
  %vm703 = vcmp.eq.s32.totalorder %v36, %v635
  %vm704 = vcmp.eq.s32.totalorder %v36, %v639
  %vm705 = vcmp.eq.s32.totalorder %v37, %v623
  %vm706 = vcmp.eq.s32.totalorder %v37, %v627
  %vm707 = vcmp.eq.s32.totalorder %v37, %v631
  %vm708 = vcmp.eq.s32.totalorder %v37, %v635
  %vm709 = vcmp.eq.s32.totalorder %v37, %v639
  %vm710 = vcmp.eq.s32.totalorder %v38, %v623
  %vm711 = vcmp.eq.s32.totalorder %v38, %v627
  %vm712 = vcmp.eq.s32.totalorder %v38, %v631
  %vm713 = vcmp.eq.s32.totalorder %v38, %v635
  %vm714 = vcmp.eq.s32.totalorder %v38, %v639
  %vm715 = vcmp.eq.s32.totalorder %v39, %v623
  %vm716 = vcmp.eq.s32.totalorder %v39, %v627
  %vm717 = vcmp.eq.s32.totalorder %v39, %v631
  %vm718 = vcmp.eq.s32.totalorder %v39, %v635
  %vm719 = vcmp.eq.s32.totalorder %v39, %v639
  %v720 = vsel %vm640, 1, 0
  %v721 = vsel %vm641, 1, 0
  %v722 = vsel %vm642, 1, 0
  %v723 = vsel %vm643, 1, 0
  %v724 = vsel %vm644, 1, 0
  %v725 = vsel %vm645, 1, 0
  %v726 = vsel %vm646, 1, 0
  %v727 = vsel %vm647, 1, 0
  %v728 = vsel %vm648, 1, 0
  %v729 = vsel %vm649, 1, 0
  %v730 = vsel %vm650, 1, 0
  %v731 = vsel %vm651, 1, 0
  %v732 = vsel %vm652, 1, 0
  %v733 = vsel %vm653, 1, 0
  %v734 = vsel %vm654, 1, 0
  %v735 = vsel %vm655, 1, 0
  %v736 = vsel %vm656, 1, 0
  %v737 = vsel %vm657, 1, 0
  %v738 = vsel %vm658, 1, 0
  %v739 = vsel %vm659, 1, 0
  %v740 = vsel %vm660, 1, 0
  %v741 = vsel %vm661, 1, 0
  %v742 = vsel %vm662, 1, 0
  %v743 = vsel %vm663, 1, 0
  %v744 = vsel %vm664, 1, 0
  %v745 = vsel %vm665, 1, 0
  %v746 = vsel %vm666, 1, 0
  %v747 = vsel %vm667, 1, 0
  %v748 = vsel %vm668, 1, 0
  %v749 = vsel %vm669, 1, 0
  %v750 = vsel %vm670, 1, 0
  %v751 = vsel %vm671, 1, 0
  %v752 = vsel %vm672, 1, 0
  %v753 = vsel %vm673, 1, 0
  %v754 = vsel %vm674, 1, 0
  %v755 = vsel %vm675, 1, 0
  %v756 = vsel %vm676, 1, 0
  %v757 = vsel %vm677, 1, 0
  %v758 = vsel %vm678, 1, 0
  %v759 = vsel %vm679, 1, 0
  %v760 = vsel %vm680, 1, 0
  %v761 = vsel %vm681, 1, 0
  %v762 = vsel %vm682, 1, 0
  %v763 = vsel %vm683, 1, 0
  %v764 = vsel %vm684, 1, 0
  %v765 = vsel %vm685, 1, 0
  %v766 = vsel %vm686, 1, 0
  %v767 = vsel %vm687, 1, 0
  %v768 = vsel %vm688, 1, 0
  %v769 = vsel %vm689, 1, 0
  %v770 = vsel %vm690, 1, 0
  %v771 = vsel %vm691, 1, 0
  %v772 = vsel %vm692, 1, 0
  %v773 = vsel %vm693, 1, 0
  %v774 = vsel %vm694, 1, 0
  %v775 = vsel %vm695, 1, 0
  %v776 = vsel %vm696, 1, 0
  %v777 = vsel %vm697, 1, 0
  %v778 = vsel %vm698, 1, 0
  %v779 = vsel %vm699, 1, 0
  %v780 = vsel %vm700, 1, 0
  %v781 = vsel %vm701, 1, 0
  %v782 = vsel %vm702, 1, 0
  %v783 = vsel %vm703, 1, 0
  %v784 = vsel %vm704, 1, 0
  %v785 = vsel %vm705, 1, 0
  %v786 = vsel %vm706, 1, 0
  %v787 = vsel %vm707, 1, 0
  %v788 = vsel %vm708, 1, 0
  %v789 = vsel %vm709, 1, 0
  %v790 = vsel %vm710, 1, 0
  %v791 = vsel %vm711, 1, 0
  %v792 = vsel %vm712, 1, 0
  %v793 = vsel %vm713, 1, 0
  %v794 = vsel %vm714, 1, 0
  %v795 = vsel %vm715, 1, 0
  %v796 = vsel %vm716, 1, 0
  %v797 = vsel %vm717, 1, 0
  %v798 = vsel %vm718, 1, 0
  %v799 = vsel %vm719, 1, 0
  %v800 = vcvt.s32.f32 %v720
  %v801 = vcvt.s32.f32 %v721
  %v802 = vcvt.s32.f32 %v722
  %v803 = vcvt.s32.f32 %v723
  %v804 = vcvt.s32.f32 %v724
  %v805 = vcvt.s32.f32 %v725
  %v806 = vcvt.s32.f32 %v726
  %v807 = vcvt.s32.f32 %v727
  %v808 = vcvt.s32.f32 %v728
  %v809 = vcvt.s32.f32 %v729
  %v810 = vcvt.s32.f32 %v730
  %v811 = vcvt.s32.f32 %v731
  %v812 = vcvt.s32.f32 %v732
  %v813 = vcvt.s32.f32 %v733
  %v814 = vcvt.s32.f32 %v734
  %v815 = vcvt.s32.f32 %v735
  %v816 = vcvt.s32.f32 %v736
  %v817 = vcvt.s32.f32 %v737
  %v818 = vcvt.s32.f32 %v738
  %v819 = vcvt.s32.f32 %v739
  %v820 = vcvt.s32.f32 %v740
  %v821 = vcvt.s32.f32 %v741
  %v822 = vcvt.s32.f32 %v742
  %v823 = vcvt.s32.f32 %v743
  %v824 = vcvt.s32.f32 %v744
  %v825 = vcvt.s32.f32 %v745
  %v826 = vcvt.s32.f32 %v746
  %v827 = vcvt.s32.f32 %v747
  %v828 = vcvt.s32.f32 %v748
  %v829 = vcvt.s32.f32 %v749
  %v830 = vcvt.s32.f32 %v750
  %v831 = vcvt.s32.f32 %v751
  %v832 = vcvt.s32.f32 %v752
  %v833 = vcvt.s32.f32 %v753
  %v834 = vcvt.s32.f32 %v754
  %v835 = vcvt.s32.f32 %v755
  %v836 = vcvt.s32.f32 %v756
  %v837 = vcvt.s32.f32 %v757
  %v838 = vcvt.s32.f32 %v758
  %v839 = vcvt.s32.f32 %v759
  %v840 = vcvt.s32.f32 %v760
  %v841 = vcvt.s32.f32 %v761
  %v842 = vcvt.s32.f32 %v762
  %v843 = vcvt.s32.f32 %v763
  %v844 = vcvt.s32.f32 %v764
  %v845 = vcvt.s32.f32 %v765
  %v846 = vcvt.s32.f32 %v766
  %v847 = vcvt.s32.f32 %v767
  %v848 = vcvt.s32.f32 %v768
  %v849 = vcvt.s32.f32 %v769
  %v850 = vcvt.s32.f32 %v770
  %v851 = vcvt.s32.f32 %v771
  %v852 = vcvt.s32.f32 %v772
  %v853 = vcvt.s32.f32 %v773
  %v854 = vcvt.s32.f32 %v774
  %v855 = vcvt.s32.f32 %v775
  %v856 = vcvt.s32.f32 %v776
  %v857 = vcvt.s32.f32 %v777
  %v858 = vcvt.s32.f32 %v778
  %v859 = vcvt.s32.f32 %v779
  %v860 = vcvt.s32.f32 %v780
  %v861 = vcvt.s32.f32 %v781
  %v862 = vcvt.s32.f32 %v782
  %v863 = vcvt.s32.f32 %v783
  %v864 = vcvt.s32.f32 %v784
  %v865 = vcvt.s32.f32 %v785
  %v866 = vcvt.s32.f32 %v786
  %v867 = vcvt.s32.f32 %v787
  %v868 = vcvt.s32.f32 %v788
  %v869 = vcvt.s32.f32 %v789
  %v870 = vcvt.s32.f32 %v790
  %v871 = vcvt.s32.f32 %v791
  %v872 = vcvt.s32.f32 %v792
  %v873 = vcvt.s32.f32 %v793
  %v874 = vcvt.s32.f32 %v794
  %v875 = vcvt.s32.f32 %v795
  %v876 = vcvt.s32.f32 %v796
  %v877 = vcvt.s32.f32 %v797
  %v878 = vcvt.s32.f32 %v798
  %v879 = vcvt.s32.f32 %v799
  %v880 = vlaneseq
  %v881 = vshrl.u32 %v880, 7
  %v882 = vsub.s32 3, %v881
  %v883 = vrot.slane %v20, %v882
  %v884 = vlaneseq
  %v885 = vshrl.u32 %v884, 7
  %v886 = vsub.s32 7, %v885
  %v887 = vrot.slane %v20, %v886
  %v888 = vlaneseq
  %v889 = vshrl.u32 %v888, 7
  %v890 = vsub.s32 3, %v889
  %v891 = vrot.slane %v21, %v890
  %v892 = vlaneseq
  %v893 = vshrl.u32 %v892, 7
  %v894 = vsub.s32 7, %v893
  %v895 = vrot.slane %v21, %v894
  %v896 = vlaneseq
  %v897 = vshrl.u32 %v896, 7
  %v898 = vsub.s32 3, %v897
  %v899 = vrot.slane %v22, %v898
  %v900 = vlaneseq
  %v901 = vshrl.u32 %v900, 7
  %v902 = vsub.s32 3, %v901
  %v903 = vrot.slane %v883, %v902
  %v904 = vlaneseq
  %v905 = vshrl.u32 %v904, 7
  %v906 = vsub.s32 3, %v905
  %v907 = vrot.slane %v887, %v906
  %v908 = vlaneseq
  %v909 = vshrl.u32 %v908, 7
  %v910 = vsub.s32 3, %v909
  %v911 = vrot.slane %v891, %v910
  %v912 = vlaneseq
  %v913 = vshrl.u32 %v912, 7
  %v914 = vsub.s32 3, %v913
  %v915 = vrot.slane %v895, %v914
  %v916 = vlaneseq
  %v917 = vshrl.u32 %v916, 7
  %v918 = vsub.s32 3, %v917
  %v919 = vrot.slane %v899, %v918
  %vm920 = vcmp.eq.s32.totalorder %v24, %v903
  %vm921 = vcmp.eq.s32.totalorder %v24, %v907
  %vm922 = vcmp.eq.s32.totalorder %v24, %v911
  %vm923 = vcmp.eq.s32.totalorder %v24, %v915
  %vm924 = vcmp.eq.s32.totalorder %v24, %v919
  %vm925 = vcmp.eq.s32.totalorder %v25, %v903
  %vm926 = vcmp.eq.s32.totalorder %v25, %v907
  %vm927 = vcmp.eq.s32.totalorder %v25, %v911
  %vm928 = vcmp.eq.s32.totalorder %v25, %v915
  %vm929 = vcmp.eq.s32.totalorder %v25, %v919
  %vm930 = vcmp.eq.s32.totalorder %v26, %v903
  %vm931 = vcmp.eq.s32.totalorder %v26, %v907
  %vm932 = vcmp.eq.s32.totalorder %v26, %v911
  %vm933 = vcmp.eq.s32.totalorder %v26, %v915
  %vm934 = vcmp.eq.s32.totalorder %v26, %v919
  %vm935 = vcmp.eq.s32.totalorder %v27, %v903
  %vm936 = vcmp.eq.s32.totalorder %v27, %v907
  %vm937 = vcmp.eq.s32.totalorder %v27, %v911
  %vm938 = vcmp.eq.s32.totalorder %v27, %v915
  %vm939 = vcmp.eq.s32.totalorder %v27, %v919
  %vm940 = vcmp.eq.s32.totalorder %v28, %v903
  %vm941 = vcmp.eq.s32.totalorder %v28, %v907
  %vm942 = vcmp.eq.s32.totalorder %v28, %v911
  %vm943 = vcmp.eq.s32.totalorder %v28, %v915
  %vm944 = vcmp.eq.s32.totalorder %v28, %v919
  %vm945 = vcmp.eq.s32.totalorder %v29, %v903
  %vm946 = vcmp.eq.s32.totalorder %v29, %v907
  %vm947 = vcmp.eq.s32.totalorder %v29, %v911
  %vm948 = vcmp.eq.s32.totalorder %v29, %v915
  %vm949 = vcmp.eq.s32.totalorder %v29, %v919
  %vm950 = vcmp.eq.s32.totalorder %v30, %v903
  %vm951 = vcmp.eq.s32.totalorder %v30, %v907
  %vm952 = vcmp.eq.s32.totalorder %v30, %v911
  %vm953 = vcmp.eq.s32.totalorder %v30, %v915
  %vm954 = vcmp.eq.s32.totalorder %v30, %v919
  %vm955 = vcmp.eq.s32.totalorder %v31, %v903
  %vm956 = vcmp.eq.s32.totalorder %v31, %v907
  %vm957 = vcmp.eq.s32.totalorder %v31, %v911
  %vm958 = vcmp.eq.s32.totalorder %v31, %v915
  %vm959 = vcmp.eq.s32.totalorder %v31, %v919
  %vm960 = vcmp.eq.s32.totalorder %v32, %v903
  %vm961 = vcmp.eq.s32.totalorder %v32, %v907
  %vm962 = vcmp.eq.s32.totalorder %v32, %v911
  %vm963 = vcmp.eq.s32.totalorder %v32, %v915
  %vm964 = vcmp.eq.s32.totalorder %v32, %v919
  %vm965 = vcmp.eq.s32.totalorder %v33, %v903
  %vm966 = vcmp.eq.s32.totalorder %v33, %v907
  %vm967 = vcmp.eq.s32.totalorder %v33, %v911
  %vm968 = vcmp.eq.s32.totalorder %v33, %v915
  %vm969 = vcmp.eq.s32.totalorder %v33, %v919
  %vm970 = vcmp.eq.s32.totalorder %v34, %v903
  %vm971 = vcmp.eq.s32.totalorder %v34, %v907
  %vm972 = vcmp.eq.s32.totalorder %v34, %v911
  %vm973 = vcmp.eq.s32.totalorder %v34, %v915
  %vm974 = vcmp.eq.s32.totalorder %v34, %v919
  %vm975 = vcmp.eq.s32.totalorder %v35, %v903
  %vm976 = vcmp.eq.s32.totalorder %v35, %v907
  %vm977 = vcmp.eq.s32.totalorder %v35, %v911
  %vm978 = vcmp.eq.s32.totalorder %v35, %v915
  %vm979 = vcmp.eq.s32.totalorder %v35, %v919
  %vm980 = vcmp.eq.s32.totalorder %v36, %v903
  %vm981 = vcmp.eq.s32.totalorder %v36, %v907
  %vm982 = vcmp.eq.s32.totalorder %v36, %v911
  %vm983 = vcmp.eq.s32.totalorder %v36, %v915
  %vm984 = vcmp.eq.s32.totalorder %v36, %v919
  %vm985 = vcmp.eq.s32.totalorder %v37, %v903
  %vm986 = vcmp.eq.s32.totalorder %v37, %v907
  %vm987 = vcmp.eq.s32.totalorder %v37, %v911
  %vm988 = vcmp.eq.s32.totalorder %v37, %v915
  %vm989 = vcmp.eq.s32.totalorder %v37, %v919
  %vm990 = vcmp.eq.s32.totalorder %v38, %v903
  %vm991 = vcmp.eq.s32.totalorder %v38, %v907
  %vm992 = vcmp.eq.s32.totalorder %v38, %v911
  %vm993 = vcmp.eq.s32.totalorder %v38, %v915
  %vm994 = vcmp.eq.s32.totalorder %v38, %v919
  %vm995 = vcmp.eq.s32.totalorder %v39, %v903
  %vm996 = vcmp.eq.s32.totalorder %v39, %v907
  %vm997 = vcmp.eq.s32.totalorder %v39, %v911
  %vm998 = vcmp.eq.s32.totalorder %v39, %v915
  %vm999 = vcmp.eq.s32.totalorder %v39, %v919
  %v1000 = vsel %vm920, 1, 0
  %v1001 = vsel %vm921, 1, 0
  %v1002 = vsel %vm922, 1, 0
  %v1003 = vsel %vm923, 1, 0
  %v1004 = vsel %vm924, 1, 0
  %v1005 = vsel %vm925, 1, 0
  %v1006 = vsel %vm926, 1, 0
  %v1007 = vsel %vm927, 1, 0
  %v1008 = vsel %vm928, 1, 0
  %v1009 = vsel %vm929, 1, 0
  %v1010 = vsel %vm930, 1, 0
  %v1011 = vsel %vm931, 1, 0
  %v1012 = vsel %vm932, 1, 0
  %v1013 = vsel %vm933, 1, 0
  %v1014 = vsel %vm934, 1, 0
  %v1015 = vsel %vm935, 1, 0
  %v1016 = vsel %vm936, 1, 0
  %v1017 = vsel %vm937, 1, 0
  %v1018 = vsel %vm938, 1, 0
  %v1019 = vsel %vm939, 1, 0
  %v1020 = vsel %vm940, 1, 0
  %v1021 = vsel %vm941, 1, 0
  %v1022 = vsel %vm942, 1, 0
  %v1023 = vsel %vm943, 1, 0
  %v1024 = vsel %vm944, 1, 0
  %v1025 = vsel %vm945, 1, 0
  %v1026 = vsel %vm946, 1, 0
  %v1027 = vsel %vm947, 1, 0
  %v1028 = vsel %vm948, 1, 0
  %v1029 = vsel %vm949, 1, 0
  %v1030 = vsel %vm950, 1, 0
  %v1031 = vsel %vm951, 1, 0
  %v1032 = vsel %vm952, 1, 0
  %v1033 = vsel %vm953, 1, 0
  %v1034 = vsel %vm954, 1, 0
  %v1035 = vsel %vm955, 1, 0
  %v1036 = vsel %vm956, 1, 0
  %v1037 = vsel %vm957, 1, 0
  %v1038 = vsel %vm958, 1, 0
  %v1039 = vsel %vm959, 1, 0
  %v1040 = vsel %vm960, 1, 0
  %v1041 = vsel %vm961, 1, 0
  %v1042 = vsel %vm962, 1, 0
  %v1043 = vsel %vm963, 1, 0
  %v1044 = vsel %vm964, 1, 0
  %v1045 = vsel %vm965, 1, 0
  %v1046 = vsel %vm966, 1, 0
  %v1047 = vsel %vm967, 1, 0
  %v1048 = vsel %vm968, 1, 0
  %v1049 = vsel %vm969, 1, 0
  %v1050 = vsel %vm970, 1, 0
  %v1051 = vsel %vm971, 1, 0
  %v1052 = vsel %vm972, 1, 0
  %v1053 = vsel %vm973, 1, 0
  %v1054 = vsel %vm974, 1, 0
  %v1055 = vsel %vm975, 1, 0
  %v1056 = vsel %vm976, 1, 0
  %v1057 = vsel %vm977, 1, 0
  %v1058 = vsel %vm978, 1, 0
  %v1059 = vsel %vm979, 1, 0
  %v1060 = vsel %vm980, 1, 0
  %v1061 = vsel %vm981, 1, 0
  %v1062 = vsel %vm982, 1, 0
  %v1063 = vsel %vm983, 1, 0
  %v1064 = vsel %vm984, 1, 0
  %v1065 = vsel %vm985, 1, 0
  %v1066 = vsel %vm986, 1, 0
  %v1067 = vsel %vm987, 1, 0
  %v1068 = vsel %vm988, 1, 0
  %v1069 = vsel %vm989, 1, 0
  %v1070 = vsel %vm990, 1, 0
  %v1071 = vsel %vm991, 1, 0
  %v1072 = vsel %vm992, 1, 0
  %v1073 = vsel %vm993, 1, 0
  %v1074 = vsel %vm994, 1, 0
  %v1075 = vsel %vm995, 1, 0
  %v1076 = vsel %vm996, 1, 0
  %v1077 = vsel %vm997, 1, 0
  %v1078 = vsel %vm998, 1, 0
  %v1079 = vsel %vm999, 1, 0
  %v1080 = vcvt.s32.f32 %v1000
  %v1081 = vcvt.s32.f32 %v1001
  %v1082 = vcvt.s32.f32 %v1002
  %v1083 = vcvt.s32.f32 %v1003
  %v1084 = vcvt.s32.f32 %v1004
  %v1085 = vcvt.s32.f32 %v1005
  %v1086 = vcvt.s32.f32 %v1006
  %v1087 = vcvt.s32.f32 %v1007
  %v1088 = vcvt.s32.f32 %v1008
  %v1089 = vcvt.s32.f32 %v1009
  %v1090 = vcvt.s32.f32 %v1010
  %v1091 = vcvt.s32.f32 %v1011
  %v1092 = vcvt.s32.f32 %v1012
  %v1093 = vcvt.s32.f32 %v1013
  %v1094 = vcvt.s32.f32 %v1014
  %v1095 = vcvt.s32.f32 %v1015
  %v1096 = vcvt.s32.f32 %v1016
  %v1097 = vcvt.s32.f32 %v1017
  %v1098 = vcvt.s32.f32 %v1018
  %v1099 = vcvt.s32.f32 %v1019
  %v1100 = vcvt.s32.f32 %v1020
  %v1101 = vcvt.s32.f32 %v1021
  %v1102 = vcvt.s32.f32 %v1022
  %v1103 = vcvt.s32.f32 %v1023
  %v1104 = vcvt.s32.f32 %v1024
  %v1105 = vcvt.s32.f32 %v1025
  %v1106 = vcvt.s32.f32 %v1026
  %v1107 = vcvt.s32.f32 %v1027
  %v1108 = vcvt.s32.f32 %v1028
  %v1109 = vcvt.s32.f32 %v1029
  %v1110 = vcvt.s32.f32 %v1030
  %v1111 = vcvt.s32.f32 %v1031
  %v1112 = vcvt.s32.f32 %v1032
  %v1113 = vcvt.s32.f32 %v1033
  %v1114 = vcvt.s32.f32 %v1034
  %v1115 = vcvt.s32.f32 %v1035
  %v1116 = vcvt.s32.f32 %v1036
  %v1117 = vcvt.s32.f32 %v1037
  %v1118 = vcvt.s32.f32 %v1038
  %v1119 = vcvt.s32.f32 %v1039
  %v1120 = vcvt.s32.f32 %v1040
  %v1121 = vcvt.s32.f32 %v1041
  %v1122 = vcvt.s32.f32 %v1042
  %v1123 = vcvt.s32.f32 %v1043
  %v1124 = vcvt.s32.f32 %v1044
  %v1125 = vcvt.s32.f32 %v1045
  %v1126 = vcvt.s32.f32 %v1046
  %v1127 = vcvt.s32.f32 %v1047
  %v1128 = vcvt.s32.f32 %v1048
  %v1129 = vcvt.s32.f32 %v1049
  %v1130 = vcvt.s32.f32 %v1050
  %v1131 = vcvt.s32.f32 %v1051
  %v1132 = vcvt.s32.f32 %v1052
  %v1133 = vcvt.s32.f32 %v1053
  %v1134 = vcvt.s32.f32 %v1054
  %v1135 = vcvt.s32.f32 %v1055
  %v1136 = vcvt.s32.f32 %v1056
  %v1137 = vcvt.s32.f32 %v1057
  %v1138 = vcvt.s32.f32 %v1058
  %v1139 = vcvt.s32.f32 %v1059
  %v1140 = vcvt.s32.f32 %v1060
  %v1141 = vcvt.s32.f32 %v1061
  %v1142 = vcvt.s32.f32 %v1062
  %v1143 = vcvt.s32.f32 %v1063
  %v1144 = vcvt.s32.f32 %v1064
  %v1145 = vcvt.s32.f32 %v1065
  %v1146 = vcvt.s32.f32 %v1066
  %v1147 = vcvt.s32.f32 %v1067
  %v1148 = vcvt.s32.f32 %v1068
  %v1149 = vcvt.s32.f32 %v1069
  %v1150 = vcvt.s32.f32 %v1070
  %v1151 = vcvt.s32.f32 %v1071
  %v1152 = vcvt.s32.f32 %v1072
  %v1153 = vcvt.s32.f32 %v1073
  %v1154 = vcvt.s32.f32 %v1074
  %v1155 = vcvt.s32.f32 %v1075
  %v1156 = vcvt.s32.f32 %v1076
  %v1157 = vcvt.s32.f32 %v1077
  %v1158 = vcvt.s32.f32 %v1078
  %v1159 = vcvt.s32.f32 %v1079
  %v1160 = vld [vmem:[%s1] sm:$0xff]
  %v1161 = vld [vmem:[%s1 + $0x8] sm:$0xff]
  %v1162 = vld [vmem:[%s1 + $0x10] sm:$0xff]
  %v1163 = vld [vmem:[%s1 + $0x18] sm:$0xff]
  %v1164 = vld [vmem:[%s2] sm:$0xff]
  %1166 = vset.pattern.permute.xlu0 0
  %1167 = vperm.xlu0 %1166, %v1164
  %v1168 = vpop.permute.xlu0 %1167
  %1170 = vmatprep.subr.mxu0 %v241
  %1171 = vmatpush1.msra.mxu0 %v240
  %1172 = vmatprep.subr.mxu0 %v246
  %1173 = vmatpush1.msra.mxu0 %v245
  %1174 = vmatprep.subr.mxu0 %v251
  %1175 = vmatpush1.msra.mxu0 %v250
  %1176 = vmatprep.subr.mxu0 %v256
  %1177 = vmatpush1.msra.mxu0 %v255
  %1178 = vmatprep.subr.mxu0 %v261
  %1179 = vmatpush1.msra.mxu0 %v260
  %1180 = vmatprep.subr.mxu0 %v266
  %1181 = vmatpush1.msra.mxu0 %v265
  %1182 = vmatprep.subr.mxu0 %v271
  %1183 = vmatpush1.msra.mxu0 %v270
  %1184 = vmatprep.subr.mxu0 %v276
  %1185 = vmatpush1.msra.mxu0 %v275
  %1186 = vmatprep.subr.mxu0 %v281
  %1187 = vmatpush1.msra.mxu0 %v280
  %1188 = vmatprep.subr.mxu0 %v286
  %1189 = vmatpush1.msra.mxu0 %v285
  %1190 = vmatprep.subr.mxu0 %v291
  %1191 = vmatpush1.msra.mxu0 %v290
  %1192 = vmatprep.subr.mxu0 %v296
  %1193 = vmatpush1.msra.mxu0 %v295
  %1194 = vmatprep.subr.mxu0 %v301
  %1195 = vmatpush1.msra.mxu0 %v300
  %1196 = vmatprep.subr.mxu0 %v306
  %1197 = vmatpush1.msra.mxu0 %v305
  %1198 = vmatprep.subr.mxu0 %v311
  %1199 = vmatpush1.msra.mxu0 %v310
  %1200 = vmatprep.subr.mxu0 %v316
  %1201 = vmatpush1.msra.mxu0 %v315
  %1202 = vmatprep.subr.mxu0 %v521
  %1203 = vmatpush1.msra.mxu0 %v520
  %1204 = vmatprep.subr.mxu0 %v526
  %1205 = vmatpush1.msra.mxu0 %v525
  %1206 = vmatprep.subr.mxu0 %v531
  %1207 = vmatpush1.msra.mxu0 %v530
  %1208 = vmatprep.subr.mxu0 %v536
  %1209 = vmatpush1.msra.mxu0 %v535
  %1210 = vmatprep.subr.mxu0 %v541
  %1211 = vmatpush1.msra.mxu0 %v540
  %1212 = vmatprep.subr.mxu0 %v546
  %1213 = vmatpush1.msra.mxu0 %v545
  %1214 = vmatprep.subr.mxu0 %v551
  %1215 = vmatpush1.msra.mxu0 %v550
  %1216 = vmatprep.subr.mxu0 %v556
  %1217 = vmatpush1.msra.mxu0 %v555
  %1218 = vmatprep.subr.mxu0 %v561
  %1219 = vmatpush1.msra.mxu0 %v560
  %1220 = vmatprep.subr.mxu0 %v566
  %1221 = vmatpush1.msra.mxu0 %v565
  %1222 = vmatprep.subr.mxu0 %v571
  %1223 = vmatpush1.msra.mxu0 %v570
  %1224 = vmatprep.subr.mxu0 %v576
  %1225 = vmatpush1.msra.mxu0 %v575
  %1226 = vmatprep.subr.mxu0 %v581
  %1227 = vmatpush1.msra.mxu0 %v580
  %1228 = vmatprep.subr.mxu0 %v586
  %1229 = vmatpush1.msra.mxu0 %v585
  %1230 = vmatprep.subr.mxu0 %v591
  %1231 = vmatpush1.msra.mxu0 %v590
  %1232 = vmatprep.subr.mxu0 %v596
  %1233 = vmatpush1.msra.mxu0 %v595
  %1234 = vmatprep.mubr.f32.mxu0 %v1161
  %1235 = vmatmul.mubr.f32.gmra.mrb[0].mxu0 %v1160
  %v1236 = vpop.f32.mrb[0].mxu0
  %v1237 = vadd.f32 %v1168, %v1236
  %v1238 = vpop.f32.mrb[0].mxu0
  %v1239 = vadd.f32 %v1168, %v1238
  %1240 = vdwg.mxu0
  %1241 = vmatprep.subr.mxu0 %v801
  %1242 = vmatpush1.msra.mxu0 %v800
  %1243 = vmatprep.subr.mxu0 %v806
  %1244 = vmatpush1.msra.mxu0 %v805
  %1245 = vmatprep.subr.mxu0 %v811
  %1246 = vmatpush1.msra.mxu0 %v810
  %1247 = vmatprep.subr.mxu0 %v816
  %1248 = vmatpush1.msra.mxu0 %v815
  %1249 = vmatprep.subr.mxu0 %v821
  %1250 = vmatpush1.msra.mxu0 %v820
  %1251 = vmatprep.subr.mxu0 %v826
  %1252 = vmatpush1.msra.mxu0 %v825
  %1253 = vmatprep.subr.mxu0 %v831
  %1254 = vmatpush1.msra.mxu0 %v830
  %1255 = vmatprep.subr.mxu0 %v836
  %1256 = vmatpush1.msra.mxu0 %v835
  %1257 = vmatprep.subr.mxu0 %v841
  %1258 = vmatpush1.msra.mxu0 %v840
  %1259 = vmatprep.subr.mxu0 %v846
  %1260 = vmatpush1.msra.mxu0 %v845
  %1261 = vmatprep.subr.mxu0 %v851
  %1262 = vmatpush1.msra.mxu0 %v850
  %1263 = vmatprep.subr.mxu0 %v856
  %1264 = vmatpush1.msra.mxu0 %v855
  %1265 = vmatprep.subr.mxu0 %v861
  %1266 = vmatpush1.msra.mxu0 %v860
  %1267 = vmatprep.subr.mxu0 %v866
  %1268 = vmatpush1.msra.mxu0 %v865
  %1269 = vmatprep.subr.mxu0 %v871
  %1270 = vmatpush1.msra.mxu0 %v870
  %1271 = vmatprep.subr.mxu0 %v876
  %1272 = vmatpush1.msra.mxu0 %v875
  %1273 = vmatprep.subr.mxu0 %v1081
  %1274 = vmatpush1.msra.mxu0 %v1080
  %1275 = vmatprep.subr.mxu0 %v1086
  %1276 = vmatpush1.msra.mxu0 %v1085
  %1277 = vmatprep.subr.mxu0 %v1091
  %1278 = vmatpush1.msra.mxu0 %v1090
  %1279 = vmatprep.subr.mxu0 %v1096
  %1280 = vmatpush1.msra.mxu0 %v1095
  %1281 = vmatprep.subr.mxu0 %v1101
  %1282 = vmatpush1.msra.mxu0 %v1100
  %1283 = vmatprep.subr.mxu0 %v1106
  %1284 = vmatpush1.msra.mxu0 %v1105
  %1285 = vmatprep.subr.mxu0 %v1111
  %1286 = vmatpush1.msra.mxu0 %v1110
  %1287 = vmatprep.subr.mxu0 %v1116
  %1288 = vmatpush1.msra.mxu0 %v1115
  %1289 = vmatprep.subr.mxu0 %v1121
  %1290 = vmatpush1.msra.mxu0 %v1120
  %1291 = vmatprep.subr.mxu0 %v1126
  %1292 = vmatpush1.msra.mxu0 %v1125
  %1293 = vmatprep.subr.mxu0 %v1131
  %1294 = vmatpush1.msra.mxu0 %v1130
  %1295 = vmatprep.subr.mxu0 %v1136
  %1296 = vmatpush1.msra.mxu0 %v1135
  %1297 = vmatprep.subr.mxu0 %v1141
  %1298 = vmatpush1.msra.mxu0 %v1140
  %1299 = vmatprep.subr.mxu0 %v1146
  %1300 = vmatpush1.msra.mxu0 %v1145
  %1301 = vmatprep.subr.mxu0 %v1151
  %1302 = vmatpush1.msra.mxu0 %v1150
  %1303 = vmatprep.subr.mxu0 %v1156
  %1304 = vmatpush1.msra.mxu0 %v1155
  %1305 = vmatprep.mubr.f32.mxu0 %v1163
  %1306 = vmatmul.mubr.f32.gmra.mrb[0].mxu0 %v1162
  %v1307 = vpop.f32.mrb[0].mxu0
  %v1308 = vadd.f32 %v1237, %v1307
  %v1309 = vpop.f32.mrb[0].mxu0
  %v1310 = vadd.f32 %v1239, %v1309
  %1311 = vdwg.mxu0
  %1312 = vmatprep.subr.mxu0 %v243
  %1313 = vmatpush1.msra.mxu0 %v242
  %1314 = vmatprep.subr.mxu0 %v248
  %1315 = vmatpush1.msra.mxu0 %v247
  %1316 = vmatprep.subr.mxu0 %v253
  %1317 = vmatpush1.msra.mxu0 %v252
  %1318 = vmatprep.subr.mxu0 %v258
  %1319 = vmatpush1.msra.mxu0 %v257
  %1320 = vmatprep.subr.mxu0 %v263
  %1321 = vmatpush1.msra.mxu0 %v262
  %1322 = vmatprep.subr.mxu0 %v268
  %1323 = vmatpush1.msra.mxu0 %v267
  %1324 = vmatprep.subr.mxu0 %v273
  %1325 = vmatpush1.msra.mxu0 %v272
  %1326 = vmatprep.subr.mxu0 %v278
  %1327 = vmatpush1.msra.mxu0 %v277
  %1328 = vmatprep.subr.mxu0 %v283
  %1329 = vmatpush1.msra.mxu0 %v282
  %1330 = vmatprep.subr.mxu0 %v288
  %1331 = vmatpush1.msra.mxu0 %v287
  %1332 = vmatprep.subr.mxu0 %v293
  %1333 = vmatpush1.msra.mxu0 %v292
  %1334 = vmatprep.subr.mxu0 %v298
  %1335 = vmatpush1.msra.mxu0 %v297
  %1336 = vmatprep.subr.mxu0 %v303
  %1337 = vmatpush1.msra.mxu0 %v302
  %1338 = vmatprep.subr.mxu0 %v308
  %1339 = vmatpush1.msra.mxu0 %v307
  %1340 = vmatprep.subr.mxu0 %v313
  %1341 = vmatpush1.msra.mxu0 %v312
  %1342 = vmatprep.subr.mxu0 %v318
  %1343 = vmatpush1.msra.mxu0 %v317
  %1344 = vmatprep.subr.mxu0 %v523
  %1345 = vmatpush1.msra.mxu0 %v522
  %1346 = vmatprep.subr.mxu0 %v528
  %1347 = vmatpush1.msra.mxu0 %v527
  %1348 = vmatprep.subr.mxu0 %v533
  %1349 = vmatpush1.msra.mxu0 %v532
  %1350 = vmatprep.subr.mxu0 %v538
  %1351 = vmatpush1.msra.mxu0 %v537
  %1352 = vmatprep.subr.mxu0 %v543
  %1353 = vmatpush1.msra.mxu0 %v542
  %1354 = vmatprep.subr.mxu0 %v548
  %1355 = vmatpush1.msra.mxu0 %v547
  %1356 = vmatprep.subr.mxu0 %v553
  %1357 = vmatpush1.msra.mxu0 %v552
  %1358 = vmatprep.subr.mxu0 %v558
  %1359 = vmatpush1.msra.mxu0 %v557
  %1360 = vmatprep.subr.mxu0 %v563
  %1361 = vmatpush1.msra.mxu0 %v562
  %1362 = vmatprep.subr.mxu0 %v568
  %1363 = vmatpush1.msra.mxu0 %v567
  %1364 = vmatprep.subr.mxu0 %v573
  %1365 = vmatpush1.msra.mxu0 %v572
  %1366 = vmatprep.subr.mxu0 %v578
  %1367 = vmatpush1.msra.mxu0 %v577
  %1368 = vmatprep.subr.mxu0 %v583
  %1369 = vmatpush1.msra.mxu0 %v582
  %1370 = vmatprep.subr.mxu0 %v588
  %1371 = vmatpush1.msra.mxu0 %v587
  %1372 = vmatprep.subr.mxu0 %v593
  %1373 = vmatpush1.msra.mxu0 %v592
  %1374 = vmatprep.subr.mxu0 %v598
  %1375 = vmatpush1.msra.mxu0 %v597
  %1376 = vmatprep.mubr.f32.mxu0 %v1161
  %1377 = vmatmul.mubr.f32.gmra.mrb[0].mxu0 %v1160
  %v1378 = vpop.f32.mrb[0].mxu0
  %v1379 = vadd.f32 %v1168, %v1378
  %v1380 = vpop.f32.mrb[0].mxu0
  %v1381 = vadd.f32 %v1168, %v1380
  %1382 = vdwg.mxu0
  %1383 = vmatprep.subr.mxu0 %v803
  %1384 = vmatpush1.msra.mxu0 %v802
  %1385 = vmatprep.subr.mxu0 %v808
  %1386 = vmatpush1.msra.mxu0 %v807
  %1387 = vmatprep.subr.mxu0 %v813
  %1388 = vmatpush1.msra.mxu0 %v812
  %1389 = vmatprep.subr.mxu0 %v818
  %1390 = vmatpush1.msra.mxu0 %v817
  %1391 = vmatprep.subr.mxu0 %v823
  %1392 = vmatpush1.msra.mxu0 %v822
  %1393 = vmatprep.subr.mxu0 %v828
  %1394 = vmatpush1.msra.mxu0 %v827
  %1395 = vmatprep.subr.mxu0 %v833
  %1396 = vmatpush1.msra.mxu0 %v832
  %1397 = vmatprep.subr.mxu0 %v838
  %1398 = vmatpush1.msra.mxu0 %v837
  %1399 = vmatprep.subr.mxu0 %v843
  %1400 = vmatpush1.msra.mxu0 %v842
  %1401 = vmatprep.subr.mxu0 %v848
  %1402 = vmatpush1.msra.mxu0 %v847
  %1403 = vmatprep.subr.mxu0 %v853
  %1404 = vmatpush1.msra.mxu0 %v852
  %1405 = vmatprep.subr.mxu0 %v858
  %1406 = vmatpush1.msra.mxu0 %v857
  %1407 = vmatprep.subr.mxu0 %v863
  %1408 = vmatpush1.msra.mxu0 %v862
  %1409 = vmatprep.subr.mxu0 %v868
  %1410 = vmatpush1.msra.mxu0 %v867
  %1411 = vmatprep.subr.mxu0 %v873
  %1412 = vmatpush1.msra.mxu0 %v872
  %1413 = vmatprep.subr.mxu0 %v878
  %1414 = vmatpush1.msra.mxu0 %v877
  %1415 = vmatprep.subr.mxu0 %v1083
  %1416 = vmatpush1.msra.mxu0 %v1082
  %1417 = vmatprep.subr.mxu0 %v1088
  %1418 = vmatpush1.msra.mxu0 %v1087
  %1419 = vmatprep.subr.mxu0 %v1093
  %1420 = vmatpush1.msra.mxu0 %v1092
  %1421 = vmatprep.subr.mxu0 %v1098
  %1422 = vmatpush1.msra.mxu0 %v1097
  %1423 = vmatprep.subr.mxu0 %v1103
  %1424 = vmatpush1.msra.mxu0 %v1102
  %1425 = vmatprep.subr.mxu0 %v1108
  %1426 = vmatpush1.msra.mxu0 %v1107
  %1427 = vmatprep.subr.mxu0 %v1113
  %1428 = vmatpush1.msra.mxu0 %v1112
  %1429 = vmatprep.subr.mxu0 %v1118
  %1430 = vmatpush1.msra.mxu0 %v1117
  %1431 = vmatprep.subr.mxu0 %v1123
  %1432 = vmatpush1.msra.mxu0 %v1122
  %1433 = vmatprep.subr.mxu0 %v1128
  %1434 = vmatpush1.msra.mxu0 %v1127
  %1435 = vmatprep.subr.mxu0 %v1133
  %1436 = vmatpush1.msra.mxu0 %v1132
  %1437 = vmatprep.subr.mxu0 %v1138
  %1438 = vmatpush1.msra.mxu0 %v1137
  %1439 = vmatprep.subr.mxu0 %v1143
  %1440 = vmatpush1.msra.mxu0 %v1142
  %1441 = vmatprep.subr.mxu0 %v1148
  %1442 = vmatpush1.msra.mxu0 %v1147
  %1443 = vmatprep.subr.mxu0 %v1153
  %1444 = vmatpush1.msra.mxu0 %v1152
  %1445 = vmatprep.subr.mxu0 %v1158
  %1446 = vmatpush1.msra.mxu0 %v1157
  %1447 = vmatprep.mubr.f32.mxu0 %v1163
  %1448 = vmatmul.mubr.f32.gmra.mrb[0].mxu0 %v1162
  %v1449 = vpop.f32.mrb[0].mxu0
  %v1450 = vadd.f32 %v1379, %v1449
  %v1451 = vpop.f32.mrb[0].mxu0
  %v1452 = vadd.f32 %v1381, %v1451
  %1453 = vdwg.mxu0
  %1454 = vmatprep.subr.mxu0 0.0
  %1455 = vmatpush1.msra.mxu0 %v244
  %1456 = vmatprep.subr.mxu0 0.0
  %1457 = vmatpush1.msra.mxu0 %v249
  %1458 = vmatprep.subr.mxu0 0.0
  %1459 = vmatpush1.msra.mxu0 %v254
  %1460 = vmatprep.subr.mxu0 0.0
  %1461 = vmatpush1.msra.mxu0 %v259
  %1462 = vmatprep.subr.mxu0 0.0
  %1463 = vmatpush1.msra.mxu0 %v264
  %1464 = vmatprep.subr.mxu0 0.0
  %1465 = vmatpush1.msra.mxu0 %v269
  %1466 = vmatprep.subr.mxu0 0.0
  %1467 = vmatpush1.msra.mxu0 %v274
  %1468 = vmatprep.subr.mxu0 0.0
  %1469 = vmatpush1.msra.mxu0 %v279
  %1470 = vmatprep.subr.mxu0 0.0
  %1471 = vmatpush1.msra.mxu0 %v284
  %1472 = vmatprep.subr.mxu0 0.0
  %1473 = vmatpush1.msra.mxu0 %v289
  %1474 = vmatprep.subr.mxu0 0.0
  %1475 = vmatpush1.msra.mxu0 %v294
  %1476 = vmatprep.subr.mxu0 0.0
  %1477 = vmatpush1.msra.mxu0 %v299
  %1478 = vmatprep.subr.mxu0 0.0
  %1479 = vmatpush1.msra.mxu0 %v304
  %1480 = vmatprep.subr.mxu0 0.0
  %1481 = vmatpush1.msra.mxu0 %v309
  %1482 = vmatprep.subr.mxu0 0.0
  %1483 = vmatpush1.msra.mxu0 %v314
  %1484 = vmatprep.subr.mxu0 0.0
  %1485 = vmatpush1.msra.mxu0 %v319
  %1486 = vmatprep.subr.mxu0 0.0
  %1487 = vmatpush1.msra.mxu0 %v524
  %1488 = vmatprep.subr.mxu0 0.0
  %1489 = vmatpush1.msra.mxu0 %v529
  %1490 = vmatprep.subr.mxu0 0.0
  %1491 = vmatpush1.msra.mxu0 %v534
  %1492 = vmatprep.subr.mxu0 0.0
  %1493 = vmatpush1.msra.mxu0 %v539
  %1494 = vmatprep.subr.mxu0 0.0
  %1495 = vmatpush1.msra.mxu0 %v544
  %1496 = vmatprep.subr.mxu0 0.0
  %1497 = vmatpush1.msra.mxu0 %v549
  %1498 = vmatprep.subr.mxu0 0.0
  %1499 = vmatpush1.msra.mxu0 %v554
  %1500 = vmatprep.subr.mxu0 0.0
  %1501 = vmatpush1.msra.mxu0 %v559
  %1502 = vmatprep.subr.mxu0 0.0
  %1503 = vmatpush1.msra.mxu0 %v564
  %1504 = vmatprep.subr.mxu0 0.0
  %1505 = vmatpush1.msra.mxu0 %v569
  %1506 = vmatprep.subr.mxu0 0.0
  %1507 = vmatpush1.msra.mxu0 %v574
  %1508 = vmatprep.subr.mxu0 0.0
  %1509 = vmatpush1.msra.mxu0 %v579
  %1510 = vmatprep.subr.mxu0 0.0
  %1511 = vmatpush1.msra.mxu0 %v584
  %1512 = vmatprep.subr.mxu0 0.0
  %1513 = vmatpush1.msra.mxu0 %v589
  %1514 = vmatprep.subr.mxu0 0.0
  %1515 = vmatpush1.msra.mxu0 %v594
  %1516 = vmatprep.subr.mxu0 0.0
  %1517 = vmatpush1.msra.mxu0 %v599
  %1518 = vmatprep.mubr.f32.mxu0 %v1161
  %1519 = vmatmul.mubr.f32.gmra.mrb[0].mxu0 %v1160
  %v1520 = vpop.f32.mrb[0].mxu0
  %v1521 = vadd.f32 %v1168, %v1520
  %v1522 = vpop.f32.mrb[0].mxu0
  %1523 = vdwg.mxu0
  %1524 = vmatprep.subr.mxu0 0.0
  %1525 = vmatpush1.msra.mxu0 %v804
  %1526 = vmatprep.subr.mxu0 0.0
  %1527 = vmatpush1.msra.mxu0 %v809
  %1528 = vmatprep.subr.mxu0 0.0
  %1529 = vmatpush1.msra.mxu0 %v814
  %1530 = vmatprep.subr.mxu0 0.0
  %1531 = vmatpush1.msra.mxu0 %v819
  %1532 = vmatprep.subr.mxu0 0.0
  %1533 = vmatpush1.msra.mxu0 %v824
  %1534 = vmatprep.subr.mxu0 0.0
  %1535 = vmatpush1.msra.mxu0 %v829
  %1536 = vmatprep.subr.mxu0 0.0
  %1537 = vmatpush1.msra.mxu0 %v834
  %1538 = vmatprep.subr.mxu0 0.0
  %1539 = vmatpush1.msra.mxu0 %v839
  %1540 = vmatprep.subr.mxu0 0.0
  %1541 = vmatpush1.msra.mxu0 %v844
  %1542 = vmatprep.subr.mxu0 0.0
  %1543 = vmatpush1.msra.mxu0 %v849
  %1544 = vmatprep.subr.mxu0 0.0
  %1545 = vmatpush1.msra.mxu0 %v854
  %1546 = vmatprep.subr.mxu0 0.0
  %1547 = vmatpush1.msra.mxu0 %v859
  %1548 = vmatprep.subr.mxu0 0.0
  %1549 = vmatpush1.msra.mxu0 %v864
  %1550 = vmatprep.subr.mxu0 0.0
  %1551 = vmatpush1.msra.mxu0 %v869
  %1552 = vmatprep.subr.mxu0 0.0
  %1553 = vmatpush1.msra.mxu0 %v874
  %1554 = vmatprep.subr.mxu0 0.0
  %1555 = vmatpush1.msra.mxu0 %v879
  %1556 = vmatprep.subr.mxu0 0.0
  %1557 = vmatpush1.msra.mxu0 %v1084
  %1558 = vmatprep.subr.mxu0 0.0
  %1559 = vmatpush1.msra.mxu0 %v1089
  %1560 = vmatprep.subr.mxu0 0.0
  %1561 = vmatpush1.msra.mxu0 %v1094
  %1562 = vmatprep.subr.mxu0 0.0
  %1563 = vmatpush1.msra.mxu0 %v1099
  %1564 = vmatprep.subr.mxu0 0.0
  %1565 = vmatpush1.msra.mxu0 %v1104
  %1566 = vmatprep.subr.mxu0 0.0
  %1567 = vmatpush1.msra.mxu0 %v1109
  %1568 = vmatprep.subr.mxu0 0.0
  %1569 = vmatpush1.msra.mxu0 %v1114
  %1570 = vmatprep.subr.mxu0 0.0
  %1571 = vmatpush1.msra.mxu0 %v1119
  %1572 = vmatprep.subr.mxu0 0.0
  %1573 = vmatpush1.msra.mxu0 %v1124
  %1574 = vmatprep.subr.mxu0 0.0
  %1575 = vmatpush1.msra.mxu0 %v1129
  %1576 = vmatprep.subr.mxu0 0.0
  %1577 = vmatpush1.msra.mxu0 %v1134
  %1578 = vmatprep.subr.mxu0 0.0
  %1579 = vmatpush1.msra.mxu0 %v1139
  %1580 = vmatprep.subr.mxu0 0.0
  %1581 = vmatpush1.msra.mxu0 %v1144
  %1582 = vmatprep.subr.mxu0 0.0
  %1583 = vmatpush1.msra.mxu0 %v1149
  %1584 = vmatprep.subr.mxu0 0.0
  %1585 = vmatpush1.msra.mxu0 %v1154
  %1586 = vmatprep.subr.mxu0 0.0
  %1587 = vmatpush1.msra.mxu0 %v1159
  %1588 = vmatprep.mubr.f32.mxu0 %v1163
  %1589 = vmatmul.mubr.f32.gmra.mrb[0].mxu0 %v1162
  %v1590 = vpop.f32.mrb[0].mxu0
  %v1591 = vadd.f32 %v1521, %v1590
  %v1592 = vpop.f32.mrb[0].mxu0
  %1593 = vdwg.mxu0
  %v1594 = vmax.f32 %v1308, 0.0
  %v1595 = vmax.f32 %v1310, 0.0
  %v1596 = vmax.f32 %v1450, 0.0
  %v1597 = vmax.f32 %v1452, 0.0
  %v1598 = vmax.f32 %v1591, 0.0
  %1604 = vrot.lane.b32.xlu0 %v1594, 127
  %v1605 = vpop.permute.xlu0 %1604
  %1606 = vrot.lane.b32.xlu0 %v1595, 127
  %v1607 = vpop.permute.xlu0 %1606
  %1608 = vrot.lane.b32.xlu0 %v1596, 127
  %v1609 = vpop.permute.xlu0 %1608
  %1610 = vrot.lane.b32.xlu0 %v1597, 127
  %v1611 = vpop.permute.xlu0 %1610
  %1612 = vrot.lane.b32.xlu0 %v1598, 127
  %v1613 = vpop.permute.xlu0 %1612
  %vm1614 = vcmask 1039360
  %v1615 = vsel %vm1614, %v1605, %v1607
  %v1616 = vsel %vm1614, %v1607, %v1609
  %v1617 = vsel %vm1614, %v1609, %v1611
  %v1618 = vsel %vm1614, %v1611, %v1613
  %1623 = vrot.lane.b32.xlu0 %v1594, 112
  %v1624 = vpop.permute.xlu0 %1623
  %1625 = vrot.lane.b32.xlu0 %v1595, 112
  %v1626 = vpop.permute.xlu0 %1625
  %1627 = vrot.lane.b32.xlu0 %v1596, 112
  %v1628 = vpop.permute.xlu0 %1627
  %1629 = vrot.lane.b32.xlu0 %v1597, 112
  %v1630 = vpop.permute.xlu0 %1629
  %1631 = vrot.lane.b32.xlu0 %v1598, 112
  %v1632 = vpop.permute.xlu0 %1631
  %vm1633 = vcmask 916480
  %v1634 = vsel %vm1633, %v1624, %v1626
  %v1635 = vsel %vm1633, %v1626, %v1628
  %v1636 = vsel %vm1633, %v1628, %v1630
  %v1637 = vsel %vm1633, %v1630, %v1632
  %1642 = vrot.lane.b32.xlu0 %v1594, 111
  %v1643 = vpop.permute.xlu0 %1642
  %1644 = vrot.lane.b32.xlu0 %v1595, 111
  %v1645 = vpop.permute.xlu0 %1644
  %1646 = vrot.lane.b32.xlu0 %v1596, 111
  %v1647 = vpop.permute.xlu0 %1646
  %1648 = vrot.lane.b32.xlu0 %v1597, 111
  %v1649 = vpop.permute.xlu0 %1648
  %1650 = vrot.lane.b32.xlu0 %v1598, 111
  %v1651 = vpop.permute.xlu0 %1650
  %vm1652 = vcmask 908288
  %v1653 = vsel %vm1652, %v1643, %v1645
  %v1654 = vsel %vm1652, %v1645, %v1647
  %v1655 = vsel %vm1652, %v1647, %v1649
  %v1656 = vsel %vm1652, %v1649, %v1651
  %v1661 = vld [vmem:[%s3] sm:$0xff]
  %v1662 = vld [vmem:[%s3 + $0x8] sm:$0xff]
  %v1663 = vld [vmem:[%s4] sm:$0xff]
  %v1664 = vld [vmem:[%s4 + $0x8] sm:$0xff]
  %1666 = vset.pattern.permute.xlu0 0
  %1667 = vperm.xlu0 %1666, %v1663
  %v1668 = vpop.permute.xlu0 %1667
  %1671 = vset.pattern.permute.xlu0 0
  %1672 = vperm.xlu0 %1671, %v1664
  %v1673 = vpop.permute.xlu0 %1672
  %vm1675 = vcmask 261120
  %v1677 = vsel %vm1675, %v1661, 0
  %v1680 = vsel %vm1675, %v1662, 0
  %1682 = vmatprep.subr.mxu0 %v1595
  %1683 = vmatpush1.msra.mxu0 %v1594
  %1684 = vmatprep.subr.mxu0 %v1616
  %1685 = vmatpush1.msra.mxu0 %v1615
  %1686 = vmatprep.subr.mxu0 %v1635
  %1687 = vmatpush1.msra.mxu0 %v1634
  %1688 = vmatprep.subr.mxu0 %v1654
  %1689 = vmatpush1.msra.mxu0 %v1653
  %1690 = vmatprep.subr.mxu0 0.0
  %1691 = vmatpush1.msra.mxu0 0.0
  %1692 = vmatprep.subr.mxu0 0.0
  %1693 = vmatpush1.msra.mxu0 0.0
  %1694 = vmatprep.subr.mxu0 0.0
  %1695 = vmatpush1.msra.mxu0 0.0
  %1696 = vmatprep.subr.mxu0 0.0
  %1697 = vmatpush1.msra.mxu0 0.0
  %1698 = vmatprep.subr.mxu0 0.0
  %1699 = vmatpush1.msra.mxu0 0.0
  %1700 = vmatprep.subr.mxu0 0.0
  %1701 = vmatpush1.msra.mxu0 0.0
  %1702 = vmatprep.subr.mxu0 0.0
  %1703 = vmatpush1.msra.mxu0 0.0
  %1704 = vmatprep.subr.mxu0 0.0
  %1705 = vmatpush1.msra.mxu0 0.0
  %1706 = vmatprep.subr.mxu0 0.0
  %1707 = vmatpush1.msra.mxu0 0.0
  %1708 = vmatprep.subr.mxu0 0.0
  %1709 = vmatpush1.msra.mxu0 0.0
  %1710 = vmatprep.subr.mxu0 0.0
  %1711 = vmatpush1.msra.mxu0 0.0
  %1712 = vmatprep.subr.mxu0 0.0
  %1713 = vmatpush1.msra.mxu0 0.0
  %1714 = vmatprep.subr.mxu0 0.0
  %1715 = vmatpush1.msra.mxu0 0.0
  %1716 = vmatprep.subr.mxu0 0.0
  %1717 = vmatpush1.msra.mxu0 0.0
  %1718 = vmatprep.subr.mxu0 0.0
  %1719 = vmatpush1.msra.mxu0 0.0
  %1720 = vmatprep.subr.mxu0 0.0
  %1721 = vmatpush1.msra.mxu0 0.0
  %1722 = vmatprep.subr.mxu0 0.0
  %1723 = vmatpush1.msra.mxu0 0.0
  %1724 = vmatprep.subr.mxu0 0.0
  %1725 = vmatpush1.msra.mxu0 0.0
  %1726 = vmatprep.subr.mxu0 0.0
  %1727 = vmatpush1.msra.mxu0 0.0
  %1728 = vmatprep.subr.mxu0 0.0
  %1729 = vmatpush1.msra.mxu0 0.0
  %1730 = vmatprep.subr.mxu0 0.0
  %1731 = vmatpush1.msra.mxu0 0.0
  %1732 = vmatprep.subr.mxu0 0.0
  %1733 = vmatpush1.msra.mxu0 0.0
  %1734 = vmatprep.subr.mxu0 0.0
  %1735 = vmatpush1.msra.mxu0 0.0
  %1736 = vmatprep.subr.mxu0 0.0
  %1737 = vmatpush1.msra.mxu0 0.0
  %1738 = vmatprep.subr.mxu0 0.0
  %1739 = vmatpush1.msra.mxu0 0.0
  %1740 = vmatprep.subr.mxu0 0.0
  %1741 = vmatpush1.msra.mxu0 0.0
  %1742 = vmatprep.subr.mxu0 0.0
  %1743 = vmatpush1.msra.mxu0 0.0
  %1744 = vmatprep.subr.mxu0 0.0
  %1745 = vmatpush1.msra.mxu0 0.0
  %1746 = vmatprep.mubr.f32.mxu0 0.0
  %1747 = vmatmul.mubr.f32.gmra.mrb[0].mxu0 %v1677
  %v1748 = vpop.f32.mrb[0].mxu0
  %v1749 = vadd.f32 %v1668, %v1748
  %v1750 = vpop.f32.mrb[0].mxu0
  %v1751 = vadd.f32 %v1668, %v1750
  %1752 = vmatprep.mubr.f32.mxu0 0.0
  %1753 = vmatmul.mubr.f32.gmra.mrb[0].mxu0 %v1680
  %v1754 = vpop.f32.mrb[0].mxu0
  %v1755 = vadd.f32 %v1673, %v1754
  %v1756 = vpop.f32.mrb[0].mxu0
  %v1757 = vadd.f32 %v1673, %v1756
  %1758 = vdwg.mxu0
  %1759 = vmatprep.subr.mxu0 %v1597
  %1760 = vmatpush1.msra.mxu0 %v1596
  %1761 = vmatprep.subr.mxu0 %v1618
  %1762 = vmatpush1.msra.mxu0 %v1617
  %1763 = vmatprep.subr.mxu0 %v1637
  %1764 = vmatpush1.msra.mxu0 %v1636
  %1765 = vmatprep.subr.mxu0 %v1656
  %1766 = vmatpush1.msra.mxu0 %v1655
  %1767 = vmatprep.subr.mxu0 0.0
  %1768 = vmatpush1.msra.mxu0 0.0
  %1769 = vmatprep.subr.mxu0 0.0
  %1770 = vmatpush1.msra.mxu0 0.0
  %1771 = vmatprep.subr.mxu0 0.0
  %1772 = vmatpush1.msra.mxu0 0.0
  %1773 = vmatprep.subr.mxu0 0.0
  %1774 = vmatpush1.msra.mxu0 0.0
  %1775 = vmatprep.subr.mxu0 0.0
  %1776 = vmatpush1.msra.mxu0 0.0
  %1777 = vmatprep.subr.mxu0 0.0
  %1778 = vmatpush1.msra.mxu0 0.0
  %1779 = vmatprep.subr.mxu0 0.0
  %1780 = vmatpush1.msra.mxu0 0.0
  %1781 = vmatprep.subr.mxu0 0.0
  %1782 = vmatpush1.msra.mxu0 0.0
  %1783 = vmatprep.subr.mxu0 0.0
  %1784 = vmatpush1.msra.mxu0 0.0
  %1785 = vmatprep.subr.mxu0 0.0
  %1786 = vmatpush1.msra.mxu0 0.0
  %1787 = vmatprep.subr.mxu0 0.0
  %1788 = vmatpush1.msra.mxu0 0.0
  %1789 = vmatprep.subr.mxu0 0.0
  %1790 = vmatpush1.msra.mxu0 0.0
  %1791 = vmatprep.subr.mxu0 0.0
  %1792 = vmatpush1.msra.mxu0 0.0
  %1793 = vmatprep.subr.mxu0 0.0
  %1794 = vmatpush1.msra.mxu0 0.0
  %1795 = vmatprep.subr.mxu0 0.0
  %1796 = vmatpush1.msra.mxu0 0.0
  %1797 = vmatprep.subr.mxu0 0.0
  %1798 = vmatpush1.msra.mxu0 0.0
  %1799 = vmatprep.subr.mxu0 0.0
  %1800 = vmatpush1.msra.mxu0 0.0
  %1801 = vmatprep.subr.mxu0 0.0
  %1802 = vmatpush1.msra.mxu0 0.0
  %1803 = vmatprep.subr.mxu0 0.0
  %1804 = vmatpush1.msra.mxu0 0.0
  %1805 = vmatprep.subr.mxu0 0.0
  %1806 = vmatpush1.msra.mxu0 0.0
  %1807 = vmatprep.subr.mxu0 0.0
  %1808 = vmatpush1.msra.mxu0 0.0
  %1809 = vmatprep.subr.mxu0 0.0
  %1810 = vmatpush1.msra.mxu0 0.0
  %1811 = vmatprep.subr.mxu0 0.0
  %1812 = vmatpush1.msra.mxu0 0.0
  %1813 = vmatprep.subr.mxu0 0.0
  %1814 = vmatpush1.msra.mxu0 0.0
  %1815 = vmatprep.subr.mxu0 0.0
  %1816 = vmatpush1.msra.mxu0 0.0
  %1817 = vmatprep.subr.mxu0 0.0
  %1818 = vmatpush1.msra.mxu0 0.0
  %1819 = vmatprep.subr.mxu0 0.0
  %1820 = vmatpush1.msra.mxu0 0.0
  %1821 = vmatprep.subr.mxu0 0.0
  %1822 = vmatpush1.msra.mxu0 0.0
  %1823 = vmatprep.mubr.f32.mxu0 0.0
  %1824 = vmatmul.mubr.f32.gmra.mrb[0].mxu0 %v1677
  %v1825 = vpop.f32.mrb[0].mxu0
  %v1826 = vadd.f32 %v1668, %v1825
  %v1827 = vpop.f32.mrb[0].mxu0
  %v1828 = vadd.f32 %v1668, %v1827
  %1829 = vmatprep.mubr.f32.mxu0 0.0
  %1830 = vmatmul.mubr.f32.gmra.mrb[0].mxu0 %v1680
  %v1831 = vpop.f32.mrb[0].mxu0
  %v1832 = vadd.f32 %v1673, %v1831
  %v1833 = vpop.f32.mrb[0].mxu0
  %v1834 = vadd.f32 %v1673, %v1833
  %1835 = vdwg.mxu0
  %v1836 = vmax.f32 %v1749, 0.0
  %v1837 = vmax.f32 %v1751, 0.0
  %v1838 = vmax.f32 %v1826, 0.0
  %v1839 = vmax.f32 %v1828, 0.0
  %v1840 = vmax.f32 %v1755, 0.0
  %v1841 = vmax.f32 %v1757, 0.0
  %v1842 = vmax.f32 %v1832, 0.0
  %v1843 = vmax.f32 %v1834, 0.0
  %1844 = vst [vmem:[%s5] sm:$0xff] %v1836
  %1845 = vst [vmem:[%s5 + $0x8] sm:$0xff] %v1837
  %1846 = vst [vmem:[%s5 + $0x10] sm:$0xff] %v1840
  %1847 = vst [vmem:[%s5 + $0x18] sm:$0xff] %v1841
  %s1848 = scalar_lea.vmem %s5, 32
  %1849 = vst [vmem:[%s1848] sm:$0xff] %v1838
  %1850 = vst [vmem:[%s1848 + $0x8] sm:$0xff] %v1839
  %1851 = vst [vmem:[%s1848 + $0x10] sm:$0xff] %v1842
  %1852 = vst [vmem:[%s1848 + $0x18] sm:$0xff] %v1843
  // Predicated region
  $region22: #{extract_entities_forward.1} parent=0 // pred_check
    _
  $region23: #{extract_entities_forward.1} parent=0 // pred_check_branch
    %1854 = sbr.rel (0) target = $region25
  $region24: #{extract_entities_forward.1} parent=0 // pred_region
    _
  $region25: #{extract_entities_forward.1} parent=0 // pred_fallthru
    _
  // Predicated region
  $region26: #{extract_entities_forward.1} parent=0 // pred_check
    _
  $region27: #{extract_entities_forward.1} parent=0 // pred_check_branch
    %1856 = sbr.rel (0) target = $region29
  $region28: #{extract_entities_forward.1} parent=0 // pred_region
    _
  $region29: #{extract_entities_forward.1} parent=0 // pred_fallthru
    _

</llo_original>
